<compile_context>
chip_gen: v7x
topology: tpu7x:2x2x1
jax: 0.10.0
libtpu: 0.0.40
codegen_flags: <defaults>
</compile_context>

<pallas_src>
import functools

import jax
import jax.numpy as jnp
from jax import lax
from jax.experimental import pallas as pl
from jax.experimental.pallas import tpu as pltpu

EPSILON = 1e-15
INFINITY = 1.0e15


def _pick_batch_block(B, S, S_full, max_tb=8):
    """Largest batch tile <= max_tb that divides B, keeps the flattened
    (TB*S, .) / (TB*S_full, .) blocks sublane-aligned, and (when possible)
    leaves >= 2 grid steps so both v7x TensorCores get work."""
    def valid(tb):
        if B % tb != 0:
            return False
        if tb == B:
            return True
        return (tb * S) % 8 == 0 and (tb * S_full) % 8 == 0

    cand = [tb for tb in range(1, B + 1) if valid(tb)]
    pref = [tb for tb in cand if tb <= max_tb and B // tb >= 2]
    if pref:
        return max(pref)
    small = [tb for tb in cand if tb <= max_tb]
    return max(small) if small else B


def _group_attention2_kernel(
    x_ref,       # (TB*S_full, D)   hidden rows of the TB batches (stored dtype)
    locg_ref,    # (TB*S, 1) int32  gather column: local_batch*S_full + loc
    loc3_ref,    # (TB, S, 1) int32 raw ip_event_loc (scatter target)
    nb_ref,      # (TB*S, 2) int32  [allowed_sup, allowed_sub] neighbour masks
    amask_ref,   # (TB, 1, S_full) int32  attention_mask
    prior_ref,   # (TB, S_full, S_full)   prior_A (stored dtype)
    wqkT_ref,    # (D, 2D)  [Wq^T | Wk^T]  resident, param_dtype
    bqk_ref,     # (1, 2D)  [bq | bk]      resident, f32
    gamma_ref,   # (1, D)   LayerNorm weight, resident, f32
    beta_ref,    # (1, D)   LayerNorm bias,   resident, f32
    cprior_ref,  # (TB, S_full, S_full) out: C_prior
    anew_ref,    # (TB, S_full, S_full) out: A_new
    *, ln_eps, d_model, tb, s_ev, s_full, d,
):
    tbs = tb * s_ev          # stacked event rows
    tbsf = tb * s_full       # stacked hidden rows

    x = x_ref[...]                                        # (TB*S_full, D)
    locg = locg_ref[...]                                  # (TB*S, 1) int32

    # -- 1. gather event rows: block-diagonal one-hot matmul (MXU, exact) ----
    lane = lax.broadcasted_iota(jnp.int32, (tbs, tbsf), 1)
    gath = (lane == locg).astype(x.dtype)                 # exact 0/1 one-hot
    subset = jnp.dot(gath, x, preferred_element_type=jnp.float32)  # (TB*S, D)

    # -- 2. LayerNorm over D (f32) --------------------------------------------
    mean = jnp.mean(subset, axis=-1, keepdims=True)
    cen = subset - mean
    var = jnp.mean(cen * cen, axis=-1, keepdims=True)
    ctx = cen * lax.rsqrt(var + ln_eps) * gamma_ref[...] + beta_ref[...]

    # -- 3. fused query|key projection (bf16 operands, f32 accumulation) ------
    ctx_p = ctx.astype(wqkT_ref.dtype)
    qk = jnp.dot(ctx_p, wqkT_ref[...],
                 preferred_element_type=jnp.float32) + bqk_ref[...]
    q = qk[:, :d]                                         # (TB*S, D) f32
    k = qk[:, d:]                                         # (TB*S, D) f32

    # -- 4. neighbour-only scores (|i-j| == 1) + exact masked softmax ---------
    zrow = jnp.zeros((1, d), jnp.float32)
    k_up = jnp.concatenate([k[1:], zrow], axis=0)         # k[i+1]
    k_dn = jnp.concatenate([zrow, k[:-1]], axis=0)        # k[i-1]
    inv_scale = 2.0 / d_model
    s_sup = jnp.sum(q * k_up, axis=-1, keepdims=True) * inv_scale  # (TB*S, 1)
    s_sub = jnp.sum(q * k_dn, axis=-1, keepdims=True) * inv_scale

    nb = nb_ref[...]
    asup = nb[:, 0:1] != 0                                # key i+1 allowed
    asub = nb[:, 1:2] != 0                                # key i-1 allowed
    m = jnp.maximum(s_sup, s_sub)
    e_sup = jnp.exp(s_sup - m)
    e_sub = jnp.exp(s_sub - m)
    denom = e_sup + e_sub
    unif = jnp.float32(1.0 / s_ev)                        # fully-masked rows
    a_sup = jnp.where(asup & asub, e_sup / denom,
                      jnp.where(asup, 1.0, jnp.where(asub, 0.0, unif)))
    a_sub = jnp.where(asup & asub, e_sub / denom,
                      jnp.where(asub, 1.0, jnp.where(asup, 0.0, unif)))

    # -- 5. superdiag of sqrt(A * A^T + eps):  A[i,i+1] paired with A[i+1,i] --
    zcol = jnp.zeros((1, 1), jnp.float32)
    a_sub_next = jnp.concatenate([a_sub[1:], zcol], axis=0)
    adiag = jnp.sqrt(a_sup * a_sub_next + EPSILON)        # (TB*S, 1) > 0

    # -- 6. scatter into the per-batch S_full vector, build tridiagonal A_new -
    adiag3 = adiag.reshape(tb, s_ev, 1)
    loc3 = loc3_ref[...]                                  # (TB, S, 1)
    lane3 = lax.broadcasted_iota(jnp.int32, (tb, s_ev, s_full), 2)
    srow3 = lax.broadcasted_iota(jnp.int32, (tb, s_ev, s_full), 1)
    oh3 = ((lane3 == loc3) & (srow3 < s_ev - 1)).astype(jnp.float32)
    scattered = jnp.sum(oh3 * adiag3, axis=1)             # (TB, S_full)
    amask_f = amask_ref[...].reshape(tb, s_full).astype(jnp.float32)
    vrow = jnp.where(scattered > 0.0, scattered, amask_f)

    II = lax.broadcasted_iota(jnp.int32, (s_full, s_full), 0)
    JJ = lax.broadcasted_iota(jnp.int32, (s_full, s_full), 1)
    sub_part = jnp.where(II == JJ + 1, vrow[:, None, :], 0.0)  # (TB, Sf, Sf)
    a_tri = sub_part + jnp.swapaxes(sub_part, -1, -2)
    prior = prior_ref[...].astype(jnp.float32)
    a_new = prior + (1.0 - prior) * a_tri
    anew_ref[...] = a_new.astype(anew_ref.dtype)

    # -- 7. constituent prior C_prior (first triangular matmul eliminated) ----
    sup_col = jnp.sum(jnp.where(JJ == II + 1, a_new, 0.0),
                      axis=-1, keepdims=True)             # (TB, S_full, 1)
    icol = lax.broadcasted_iota(jnp.int32, (s_full, 1), 0)
    l_col = jnp.where(icol < s_full - 1, jnp.log(sup_col + EPSILON), 0.0)
    t = jnp.where(JJ >= II + 1, l_col, 0.0)               # (TB, Sf, Sf)
    tri = (JJ >= II).astype(jnp.float32)
    tri_b = jnp.broadcast_to(tri, (tb, s_full, s_full))
    c = jnp.exp(jnp.einsum("bpk,bkj->bpj", tri_b, t,
                           preferred_element_type=jnp.float32))
    c = jnp.where(JJ > II, c, 0.0)                        # keep strict upper
    c_prior = c + jnp.swapaxes(c, -1, -2) + jnp.where(JJ == II, 1.0, 0.0)
    cprior_ref[...] = c_prior.astype(cprior_ref.dtype)


def group_attention2(hidden_states, attention_mask, ip_event_loc, ip_event_mask,
                     prior_A, wk, bk, wq, bq, gamma, beta,
                     *, layer_norm_eps=1e-12, param_dtype=jnp.bfloat16,
                     batch_block=None, vmem_limit_bytes=None):
    """Returns (C_prior, A_new), matching GroupAttention2.forward."""
    B, S_full, D = hidden_states.shape
    S = ip_event_loc.shape[1]

    TB = _pick_batch_block(B, S, S_full) if batch_block is None else batch_block
    assert B % TB == 0, "batch_block must divide the batch size"

    # One-time parameter prep (single resident (D, 2D) weight, f32 biases/LN).
    wqkT = jnp.concatenate([wq.T, wk.T], axis=1).astype(param_dtype)   # (D, 2D)
    bqk = jnp.concatenate([bq, bk]).reshape(1, 2 * D).astype(jnp.float32)
    g2 = gamma.reshape(1, D).astype(jnp.float32)
    be2 = beta.reshape(1, D).astype(jnp.float32)

    # Layout plumbing (free reshapes; dominant streams keep their stored dtype).
    x2d = hidden_states.reshape(B * S_full, D)
    loc = ip_event_loc.astype(jnp.int32)
    loc3 = loc.reshape(B, S, 1)
    locg = (loc + (jnp.arange(B, dtype=jnp.int32)[:, None] % TB) * S_full
            ).reshape(B * S, 1)
    em = ip_event_mask.astype(jnp.int32)
    asup = jnp.concatenate([em[:, 1:], jnp.zeros((B, 1), jnp.int32)], axis=1)
    asub = jnp.concatenate([jnp.zeros((B, 1), jnp.int32), em[:, :-1]], axis=1)
    nb = jnp.stack([asup, asub], axis=-1).reshape(B * S, 2)
    amask3 = attention_mask.astype(jnp.int32).reshape(B, 1, S_full)

    kernel = functools.partial(
        _group_attention2_kernel, ln_eps=float(layer_norm_eps),
        d_model=float(D), tb=TB, s_ev=S, s_full=S_full, d=D)

    c_prior, a_new = pl.pallas_call(
        kernel,
        out_shape=(
            jax.ShapeDtypeStruct((B, S_full, S_full), jnp.float32),
            jax.ShapeDtypeStruct((B, S_full, S_full), jnp.float32),
        ),
        grid_spec=pltpu.PrefetchScalarGridSpec(
            num_scalar_prefetch=0,
            grid=(B // TB,),
            in_specs=[
                pl.BlockSpec((TB * S_full, D), lambda b: (b, 0)),        # hidden
                pl.BlockSpec((TB * S, 1), lambda b: (b, 0)),             # gather col
                pl.BlockSpec((TB, S, 1), lambda b: (b, 0, 0)),           # raw loc
                pl.BlockSpec((TB * S, 2), lambda b: (b, 0)),             # nbr masks
                pl.BlockSpec((TB, 1, S_full), lambda b: (b, 0, 0)),      # attn mask
                pl.BlockSpec((TB, S_full, S_full), lambda b: (b, 0, 0)), # prior_A
                pl.BlockSpec((D, 2 * D), lambda b: (0, 0)),              # Wq^T|Wk^T
                pl.BlockSpec((1, 2 * D), lambda b: (0, 0)),              # bq|bk
                pl.BlockSpec((1, D), lambda b: (0, 0)),                  # gamma
                pl.BlockSpec((1, D), lambda b: (0, 0)),                  # beta
            ],
            out_specs=[
                pl.BlockSpec((TB, S_full, S_full), lambda b: (b, 0, 0)), # C_prior
                pl.BlockSpec((TB, S_full, S_full), lambda b: (b, 0, 0)), # A_new
            ],
        ),
        compiler_params=pltpu.CompilerParams(
            dimension_semantics=("parallel",),
            vmem_limit_bytes=vmem_limit_bytes),
    )(x2d, locg, loc3, nb, amask3, prior_A, wqkT, bqk, g2, be2)

    return c_prior, a_new


if __name__ == "__main__":
    B, S_full, S, D = 2, 16, 8, 32
    layer_norm_eps = 1e-12

    key = jax.random.PRNGKey(0)
    keys = jax.random.split(key, 8)

    hidden_states = jax.random.normal(keys[0], (B, S_full, D), dtype=jnp.float32)
    attention_mask = (jax.random.uniform(keys[1], (B, S_full)) > 0.3).astype(jnp.int32)
    # unique, sorted event locations per batch (as the model assumes)
    ip_event_loc = jnp.stack([
        jnp.sort(jax.random.permutation(keys[2 + b], S_full)[:S]) for b in range(B)
    ]).astype(jnp.int32)
    ip_event_mask = (jax.random.uniform(keys[4], (B, S)) > 0.2).astype(jnp.int32)
    prior_A = jax.random.uniform(keys[5], (B, S_full, S_full), dtype=jnp.float32)

    # nn.Linear (xavier-ish) + LayerNorm init like the torch module
    wk = jax.random.normal(keys[6], (D, D), dtype=jnp.float32) * (1.0 / jnp.sqrt(D))
    bk = jnp.zeros((D,), jnp.float32)
    wq = jax.random.normal(keys[7], (D, D), dtype=jnp.float32) * (1.0 / jnp.sqrt(D))
    bq = jnp.zeros((D,), jnp.float32)
    gamma = jax.random.uniform(jax.random.PRNGKey(1), (D,), dtype=jnp.float32)
    beta = jnp.zeros((D,), jnp.float32)

    c_prior, a_new = group_attention2(
        hidden_states, attention_mask, ip_event_loc, ip_event_mask, prior_A,
        wk, bk, wq, bq, gamma, beta, layer_norm_eps=layer_norm_eps)
    c_prior, a_new = jax.block_until_ready((c_prior, a_new))

    # ---------------- pure-JAX reference (mirrors the torch forward) --------
    P = jax.lax.Precision.HIGHEST
    bidx = jnp.arange(B)[:, None]
    subset = hidden_states[bidx, ip_event_loc]                       # (B, S, D)
    mu = subset.mean(-1, keepdims=True)
    var = ((subset - mu) ** 2).mean(-1, keepdims=True)
    ctx = (subset - mu) / jnp.sqrt(var + layer_norm_eps) * gamma + beta
    key_r = jnp.matmul(ctx, wk.T, precision=P) + bk
    query_r = jnp.matmul(ctx, wq.T, precision=P) + bq
    scores = jnp.matmul(query_r, jnp.swapaxes(key_r, -1, -2), precision=P) / (D / 2)
    ii = jnp.arange(S)[:, None]
    jj = jnp.arange(S)[None, :]
    neigh = jnp.abs(ii - jj) == 1
    mask = (ip_event_mask[:, None, :] != 0) & neigh[None]
    scores = jnp.where(mask, scores, -INFINITY)
    A = jax.nn.softmax(scores, axis=-1)
    A = jnp.sqrt(A * jnp.swapaxes(A, -1, -2) + EPSILON)
    A_sup = jnp.diagonal(A, offset=1, axis1=-2, axis2=-1)            # (B, S-1)
    A_vec = attention_mask.astype(jnp.float32)
    A_vec = A_vec.at[bidx, ip_event_loc[:, :-1]].set(A_sup)
    v = A_vec[:, :-1]                                                # (B, S_full-1)
    idx = jnp.arange(S_full - 1)
    a_new_ref = jnp.zeros((B, S_full, S_full), jnp.float32).at[:, idx, idx + 1].set(v)
    a_new_ref = a_new_ref + jnp.swapaxes(a_new_ref, -1, -2)
    a_new_ref = prior_A + (1.0 - prior_A) * a_new_ref
    sup_full = jnp.diag(jnp.ones(S_full - 1, jnp.float32), k=1)
    tri = jnp.triu(jnp.ones((S_full, S_full), jnp.float32))
    t = jnp.matmul(jnp.where(sup_full[None] != 0,
                             jnp.log(a_new_ref + EPSILON), 0.0), tri, precision=P)
    C = jnp.exp(jnp.matmul(tri, t, precision=P))
    C = jnp.where(jnp.triu(jnp.ones((S_full, S_full)), k=1)[None] != 0, C, 0.0)
    c_prior_ref = C + jnp.swapaxes(C, -1, -2) + jnp.eye(S_full, dtype=jnp.float32)[None]

    assert c_prior.shape == (B, S_full, S_full)
    assert a_new.shape == (B, S_full, S_full)
    assert jnp.allclose(a_new, a_new_ref, atol=5e-3, rtol=5e-3), "A_new mismatch"
    assert jnp.allclose(c_prior, c_prior_ref, atol=5e-3, rtol=5e-3), "C_prior mismatch"

    print("KERNEL_OK")
</pallas_src>

<mosaic_0001>
module attributes {stable_mosaic.version = 11 : i64} {
  func.func @_group_attention2_kernel(%arg0: i32, %arg1: memref<16x32xf32, #tpu.memory_space<vmem>>, %arg2: memref<8x1xi32, #tpu.memory_space<vmem>>, %arg3: memref<1x8x1xi32, #tpu.memory_space<vmem>>, %arg4: memref<8x2xi32, #tpu.memory_space<vmem>>, %arg5: memref<1x1x16xi32, #tpu.memory_space<vmem>>, %arg6: memref<1x16x16xf32, #tpu.memory_space<vmem>>, %arg7: memref<32x64xbf16, #tpu.memory_space<vmem>>, %arg8: memref<1x64xf32, #tpu.memory_space<vmem>>, %arg9: memref<1x32xf32, #tpu.memory_space<vmem>>, %arg10: memref<1x32xf32, #tpu.memory_space<vmem>>, %arg11: memref<1x16x16xf32, #tpu.memory_space<vmem>>, %arg12: memref<1x16x16xf32, #tpu.memory_space<vmem>>) attributes {dimension_semantics = [#tpu.dimension_semantics<parallel>], iteration_bounds = array<i64: 2>, scalar_prefetch = 0 : i64, scratch_operands = 0 : i64, tpu.core_type = #tpu.core_type<tc>, window_params = [{transform_indices = @transform_0, window_bounds = array<i64: 16, 32>}, {transform_indices = @transform_1, window_bounds = array<i64: 8, 1>}, {transform_indices = @transform_2, window_bounds = array<i64: 1, 8, 1>}, {transform_indices = @transform_3, window_bounds = array<i64: 8, 2>}, {transform_indices = @transform_4, window_bounds = array<i64: 1, 1, 16>}, {transform_indices = @transform_5, window_bounds = array<i64: 1, 16, 16>}, {pipeline_mode = #tpu.pipeline_mode<synchronous>, transform_indices = @transform_6, window_bounds = array<i64: 32, 64>}, {pipeline_mode = #tpu.pipeline_mode<synchronous>, transform_indices = @transform_7, window_bounds = array<i64: 1, 64>}, {pipeline_mode = #tpu.pipeline_mode<synchronous>, transform_indices = @transform_8, window_bounds = array<i64: 1, 32>}, {pipeline_mode = #tpu.pipeline_mode<synchronous>, transform_indices = @transform_9, window_bounds = array<i64: 1, 32>}, {transform_indices = @transform_10, window_bounds = array<i64: 1, 16, 16>}, {transform_indices = @transform_11, window_bounds = array<i64: 1, 16, 16>}]} {
    %c0 = arith.constant 0 : index
    %c0_0 = arith.constant 0 : index
    %0 = vector.load %arg1[%c0, %c0_0] : memref<16x32xf32, #tpu.memory_space<vmem>>, vector<16x32xf32>
    %c0_1 = arith.constant 0 : index
    %c0_2 = arith.constant 0 : index
    %1 = vector.load %arg2[%c0_1, %c0_2] : memref<8x1xi32, #tpu.memory_space<vmem>>, vector<8x1xi32>
    %2 = tpu.iota {dimensions = array<i32: 1>} : vector<8x16xi32>
    %3 = vector.broadcast %1 : vector<8x1xi32> to vector<8x16xi32>
    %4 = arith.cmpi eq, %2, %3 : vector<8x16xi32>
    %5 = arith.extui %4 : vector<8x16xi1> to vector<8x16xi32>
    %6 = arith.sitofp %5 : vector<8x16xi32> to vector<8x16xf32>
    %cst = arith.constant dense<0.000000e+00> : vector<8x32xf32>
    %7 = tpu.matmul %6, %0, %cst {dimension_numbers = #tpu.dot_dimension_numbers<[1], [0], [0], [1], [0, 0, 1, 1], [], []>} : vector<8x16xf32>, vector<16x32xf32>, vector<8x32xf32> -> vector<8x32xf32>
    %cst_3 = arith.constant dense<0.000000e+00> : vector<8xf32>
    %8 = vector.multi_reduction <add>, %7, %cst_3 [1] : vector<8x32xf32> to vector<8xf32>
    %9 = vector.shape_cast %8 : vector<8xf32> to vector<8x1xf32>
    %cst_4 = arith.constant 3.200000e+01 : f32
    %10 = vector.broadcast %cst_4 : f32 to vector<8x1xf32>
    %11 = arith.divf %9, %10 : vector<8x1xf32>
    %12 = vector.broadcast %11 : vector<8x1xf32> to vector<8x32xf32>
    %13 = arith.subf %7, %12 : vector<8x32xf32>
    %14 = arith.mulf %13, %13 : vector<8x32xf32>
    %cst_5 = arith.constant dense<0.000000e+00> : vector<8xf32>
    %15 = vector.multi_reduction <add>, %14, %cst_5 [1] : vector<8x32xf32> to vector<8xf32>
    %16 = vector.shape_cast %15 : vector<8xf32> to vector<8x1xf32>
    %cst_6 = arith.constant 3.200000e+01 : f32
    %17 = vector.broadcast %cst_6 : f32 to vector<8x1xf32>
    %18 = arith.divf %16, %17 : vector<8x1xf32>
    %cst_7 = arith.constant 9.99999996E-13 : f32
    %19 = vector.broadcast %cst_7 : f32 to vector<8x1xf32>
    %20 = arith.addf %18, %19 : vector<8x1xf32>
    %21 = math.rsqrt %20 : vector<8x1xf32>
    %22 = vector.broadcast %21 : vector<8x1xf32> to vector<8x32xf32>
    %23 = arith.mulf %13, %22 : vector<8x32xf32>
    %c0_8 = arith.constant 0 : index
    %c0_9 = arith.constant 0 : index
    %24 = vector.load %arg9[%c0_8, %c0_9] : memref<1x32xf32, #tpu.memory_space<vmem>>, vector<1x32xf32>
    %25 = vector.broadcast %24 : vector<1x32xf32> to vector<8x32xf32>
    %26 = arith.mulf %23, %25 : vector<8x32xf32>
    %c0_10 = arith.constant 0 : index
    %c0_11 = arith.constant 0 : index
    %27 = vector.load %arg10[%c0_10, %c0_11] : memref<1x32xf32, #tpu.memory_space<vmem>>, vector<1x32xf32>
    %28 = vector.broadcast %27 : vector<1x32xf32> to vector<8x32xf32>
    %29 = arith.addf %26, %28 : vector<8x32xf32>
    %30 = arith.truncf %29 : vector<8x32xf32> to vector<8x32xbf16>
    %c0_12 = arith.constant 0 : index
    %c0_13 = arith.constant 0 : index
    %31 = vector.load %arg7[%c0_12, %c0_13] : memref<32x64xbf16, #tpu.memory_space<vmem>>, vector<32x64xbf16>
    %cst_14 = arith.constant dense<0.000000e+00> : vector<8x64xf32>
    %32 = tpu.matmul %30, %31, %cst_14 {dimension_numbers = #tpu.dot_dimension_numbers<[1], [0], [0], [1], [0, 0, 1, 1], [], []>} : vector<8x32xbf16>, vector<32x64xbf16>, vector<8x64xf32> -> vector<8x64xf32>
    %c0_15 = arith.constant 0 : index
    %c0_16 = arith.constant 0 : index
    %33 = vector.load %arg8[%c0_15, %c0_16] : memref<1x64xf32, #tpu.memory_space<vmem>>, vector<1x64xf32>
    %34 = vector.broadcast %33 : vector<1x64xf32> to vector<8x64xf32>
    %35 = arith.addf %32, %34 : vector<8x64xf32>
    %36 = vector.extract_strided_slice %35 {offsets = [0, 0], sizes = [8, 32], strides = [1, 1]} : vector<8x64xf32> to vector<8x32xf32>
    %37 = vector.extract_strided_slice %35 {offsets = [0, 32], sizes = [8, 32], strides = [1, 1]} : vector<8x64xf32> to vector<8x32xf32>
    %cst_17 = arith.constant 0.000000e+00 : f32
    %38 = vector.broadcast %cst_17 : f32 to vector<1x32xf32>
    %39 = vector.extract_strided_slice %37 {offsets = [1, 0], sizes = [7, 32], strides = [1, 1]} : vector<8x32xf32> to vector<7x32xf32>
    %40 = tpu.concatenate %39, %38 in 0 : vector<7x32xf32>, vector<1x32xf32> -> vector<8x32xf32>
    %41 = vector.extract_strided_slice %37 {offsets = [0, 0], sizes = [7, 32], strides = [1, 1]} : vector<8x32xf32> to vector<7x32xf32>
    %42 = tpu.concatenate %38, %41 in 0 : vector<1x32xf32>, vector<7x32xf32> -> vector<8x32xf32>
    %43 = arith.mulf %36, %40 : vector<8x32xf32>
    %cst_18 = arith.constant dense<0.000000e+00> : vector<8xf32>
    %44 = vector.multi_reduction <add>, %43, %cst_18 [1] : vector<8x32xf32> to vector<8xf32>
    %45 = vector.shape_cast %44 : vector<8xf32> to vector<8x1xf32>
    %cst_19 = arith.constant 6.250000e-02 : f32
    %46 = vector.broadcast %cst_19 : f32 to vector<8x1xf32>
    %47 = arith.mulf %45, %46 : vector<8x1xf32>
    %48 = arith.mulf %36, %42 : vector<8x32xf32>
    %cst_20 = arith.constant dense<0.000000e+00> : vector<8xf32>
    %49 = vector.multi_reduction <add>, %48, %cst_20 [1] : vector<8x32xf32> to vector<8xf32>
    %50 = vector.shape_cast %49 : vector<8xf32> to vector<8x1xf32>
    %cst_21 = arith.constant 6.250000e-02 : f32
    %51 = vector.broadcast %cst_21 : f32 to vector<8x1xf32>
    %52 = arith.mulf %50, %51 : vector<8x1xf32>
    %c0_22 = arith.constant 0 : index
    %c0_23 = arith.constant 0 : index
    %53 = vector.load %arg4[%c0_22, %c0_23] : memref<8x2xi32, #tpu.memory_space<vmem>>, vector<8x2xi32>
    %54 = vector.extract_strided_slice %53 {offsets = [0, 0], sizes = [8, 1], strides = [1, 1]} : vector<8x2xi32> to vector<8x1xi32>
    %c0_i32 = arith.constant 0 : i32
    %55 = vector.broadcast %c0_i32 : i32 to vector<8x1xi32>
    %56 = arith.cmpi ne, %54, %55 : vector<8x1xi32>
    %57 = vector.extract_strided_slice %53 {offsets = [0, 1], sizes = [8, 1], strides = [1, 1]} : vector<8x2xi32> to vector<8x1xi32>
    %c0_i32_24 = arith.constant 0 : i32
    %58 = vector.broadcast %c0_i32_24 : i32 to vector<8x1xi32>
    %59 = arith.cmpi ne, %57, %58 : vector<8x1xi32>
    %60 = arith.maximumf %47, %52 : vector<8x1xf32>
    %61 = arith.subf %47, %60 : vector<8x1xf32>
    %62 = math.exp %61 : vector<8x1xf32>
    %63 = arith.subf %52, %60 : vector<8x1xf32>
    %64 = math.exp %63 : vector<8x1xf32>
    %65 = arith.addf %62, %64 : vector<8x1xf32>
    %66 = arith.andi %56, %59 : vector<8x1xi1>
    %67 = arith.divf %62, %65 : vector<8x1xf32>
    %cst_25 = arith.constant 0.000000e+00 : f32
    %cst_26 = arith.constant 1.250000e-01 : f32
    %68 = vector.broadcast %cst_25 : f32 to vector<8x1xf32>
    %69 = vector.broadcast %cst_26 : f32 to vector<8x1xf32>
    %70 = arith.select %59, %68, %69 : vector<8x1xi1>, vector<8x1xf32>
    %cst_27 = arith.constant 1.000000e+00 : f32
    %71 = vector.broadcast %cst_27 : f32 to vector<8x1xf32>
    %72 = arith.select %56, %71, %70 : vector<8x1xi1>, vector<8x1xf32>
    %73 = arith.select %66, %67, %72 : vector<8x1xi1>, vector<8x1xf32>
    %74 = arith.andi %56, %59 : vector<8x1xi1>
    %75 = arith.divf %64, %65 : vector<8x1xf32>
    %cst_28 = arith.constant 0.000000e+00 : f32
    %cst_29 = arith.constant 1.250000e-01 : f32
    %76 = vector.broadcast %cst_28 : f32 to vector<8x1xf32>
    %77 = vector.broadcast %cst_29 : f32 to vector<8x1xf32>
    %78 = arith.select %56, %76, %77 : vector<8x1xi1>, vector<8x1xf32>
    %cst_30 = arith.constant 1.000000e+00 : f32
    %79 = vector.broadcast %cst_30 : f32 to vector<8x1xf32>
    %80 = arith.select %59, %79, %78 : vector<8x1xi1>, vector<8x1xf32>
    %81 = arith.select %74, %75, %80 : vector<8x1xi1>, vector<8x1xf32>
    %cst_31 = arith.constant 0.000000e+00 : f32
    %82 = vector.broadcast %cst_31 : f32 to vector<1x1xf32>
    %83 = vector.extract_strided_slice %81 {offsets = [1, 0], sizes = [7, 1], strides = [1, 1]} : vector<8x1xf32> to vector<7x1xf32>
    %84 = tpu.concatenate %83, %82 in 0 : vector<7x1xf32>, vector<1x1xf32> -> vector<8x1xf32>
    %85 = arith.mulf %73, %84 : vector<8x1xf32>
    %cst_32 = arith.constant 1.000000e-15 : f32
    %86 = vector.broadcast %cst_32 : f32 to vector<8x1xf32>
    %87 = arith.addf %85, %86 : vector<8x1xf32>
    %88 = math.sqrt %87 : vector<8x1xf32>
    %89 = vector.shape_cast %88 : vector<8x1xf32> to vector<1x8x1xf32>
    %c0_33 = arith.constant 0 : index
    %c0_34 = arith.constant 0 : index
    %c0_35 = arith.constant 0 : index
    %90 = vector.load %arg3[%c0_33, %c0_34, %c0_35] : memref<1x8x1xi32, #tpu.memory_space<vmem>>, vector<1x8x1xi32>
    %91 = tpu.iota {dimensions = array<i32: 2>} : vector<1x8x16xi32>
    %92 = tpu.iota {dimensions = array<i32: 1>} : vector<1x8x16xi32>
    %93 = vector.broadcast %90 : vector<1x8x1xi32> to vector<1x8x16xi32>
    %94 = arith.cmpi eq, %91, %93 : vector<1x8x16xi32>
    %c7_i32 = arith.constant 7 : i32
    %95 = vector.broadcast %c7_i32 : i32 to vector<1x8x16xi32>
    %96 = arith.cmpi slt, %92, %95 : vector<1x8x16xi32>
    %97 = arith.andi %94, %96 : vector<1x8x16xi1>
    %98 = arith.extui %97 : vector<1x8x16xi1> to vector<1x8x16xi32>
    %99 = arith.sitofp %98 : vector<1x8x16xi32> to vector<1x8x16xf32>
    %100 = vector.broadcast %89 : vector<1x8x1xf32> to vector<1x8x16xf32>
    %101 = arith.mulf %99, %100 : vector<1x8x16xf32>
    %cst_36 = arith.constant dense<0.000000e+00> : vector<1x16xf32>
    %102 = vector.multi_reduction <add>, %101, %cst_36 [1] : vector<1x8x16xf32> to vector<1x16xf32>
    %c0_37 = arith.constant 0 : index
    %c0_38 = arith.constant 0 : index
    %c0_39 = arith.constant 0 : index
    %103 = vector.load %arg5[%c0_37, %c0_38, %c0_39] : memref<1x1x16xi32, #tpu.memory_space<vmem>>, vector<1x1x16xi32>
    %104 = vector.shape_cast %103 : vector<1x1x16xi32> to vector<1x16xi32>
    %105 = arith.sitofp %104 : vector<1x16xi32> to vector<1x16xf32>
    %cst_40 = arith.constant 0.000000e+00 : f32
    %106 = vector.broadcast %cst_40 : f32 to vector<1x16xf32>
    %107 = arith.cmpf ogt, %102, %106 : vector<1x16xf32>
    %108 = arith.select %107, %102, %105 : vector<1x16xi1>, vector<1x16xf32>
    %109 = tpu.iota {dimensions = array<i32: 0>} : vector<16x16xi32>
    %110 = tpu.iota {dimensions = array<i32: 1>} : vector<16x16xi32>
    %c1_i32 = arith.constant 1 : i32
    %111 = vector.broadcast %c1_i32 : i32 to vector<16x16xi32>
    %112 = arith.addi %110, %111 : vector<16x16xi32>
    %113 = arith.cmpi eq, %109, %112 : vector<16x16xi32>
    %114 = vector.shape_cast %108 : vector<1x16xf32> to vector<1x1x16xf32>
    %cst_41 = arith.constant 0.000000e+00 : f32
    %115 = vector.shape_cast %113 : vector<16x16xi1> to vector<1x16x16xi1>
    %116 = vector.shape_cast %114 : vector<1x1x16xf32> to vector<1x1x16xf32>
    %117 = vector.broadcast %116 : vector<1x1x16xf32> to vector<1x16x16xf32>
    %118 = vector.broadcast %cst_41 : f32 to vector<1x16x16xf32>
    %119 = arith.select %115, %117, %118 : vector<1x16x16xi1>, vector<1x16x16xf32>
    %120 = tpu.transpose %119, [0, 2, 1] : vector<1x16x16xf32> -> vector<1x16x16xf32>
    %121 = arith.addf %119, %120 : vector<1x16x16xf32>
    %c0_42 = arith.constant 0 : index
    %c0_43 = arith.constant 0 : index
    %c0_44 = arith.constant 0 : index
    %122 = vector.load %arg6[%c0_42, %c0_43, %c0_44] : memref<1x16x16xf32, #tpu.memory_space<vmem>>, vector<1x16x16xf32>
    %cst_45 = arith.constant 1.000000e+00 : f32
    %123 = vector.broadcast %cst_45 : f32 to vector<1x16x16xf32>
    %124 = arith.subf %123, %122 : vector<1x16x16xf32>
    %125 = arith.mulf %124, %121 : vector<1x16x16xf32>
    %126 = arith.addf %122, %125 : vector<1x16x16xf32>
    %c0_46 = arith.constant 0 : index
    %c0_47 = arith.constant 0 : index
    %c0_48 = arith.constant 0 : index
    %127 = vector.load %arg12[%c0_46, %c0_47, %c0_48] : memref<1x16x16xf32, #tpu.memory_space<vmem>>, vector<1x16x16xf32>
    tpu.vector_store %arg12[%c0_46, %c0_47, %c0_48], %126 {strides = array<i32>} : memref<1x16x16xf32, #tpu.memory_space<vmem>>, vector<1x16x16xf32>,
    %c1_i32_49 = arith.constant 1 : i32
    %128 = vector.broadcast %c1_i32_49 : i32 to vector<16x16xi32>
    %129 = arith.addi %109, %128 : vector<16x16xi32>
    %130 = arith.cmpi eq, %110, %129 : vector<16x16xi32>
    %cst_50 = arith.constant 0.000000e+00 : f32
    %131 = vector.shape_cast %130 : vector<16x16xi1> to vector<1x16x16xi1>
    %132 = vector.broadcast %cst_50 : f32 to vector<1x16x16xf32>
    %133 = arith.select %131, %126, %132 : vector<1x16x16xi1>, vector<1x16x16xf32>
    %cst_51 = arith.constant dense<0.000000e+00> : vector<1x16xf32>
    %134 = vector.multi_reduction <add>, %133, %cst_51 [2] : vector<1x16x16xf32> to vector<1x16xf32>
    %135 = vector.shape_cast %134 : vector<1x16xf32> to vector<1x16x1xf32>
    %136 = tpu.iota {dimensions = array<i32: 0>} : vector<16x1xi32>
    %c15_i32 = arith.constant 15 : i32
    %137 = vector.broadcast %c15_i32 : i32 to vector<16x1xi32>
    %138 = arith.cmpi slt, %136, %137 : vector<16x1xi32>
    %cst_52 = arith.constant 1.000000e-15 : f32
    %139 = vector.broadcast %cst_52 : f32 to vector<1x16x1xf32>
    %140 = arith.addf %135, %139 : vector<1x16x1xf32>
    %141 = math.log %140 : vector<1x16x1xf32>
    %cst_53 = arith.constant 0.000000e+00 : f32
    %142 = vector.shape_cast %138 : vector<16x1xi1> to vector<1x16x1xi1>
    %143 = vector.broadcast %cst_53 : f32 to vector<1x16x1xf32>
    %144 = arith.select %142, %141, %143 : vector<1x16x1xi1>, vector<1x16x1xf32>
    %c1_i32_54 = arith.constant 1 : i32
    %145 = vector.broadcast %c1_i32_54 : i32 to vector<16x16xi32>
    %146 = arith.addi %109, %145 : vector<16x16xi32>
    %147 = arith.cmpi sge, %110, %146 : vector<16x16xi32>
    %cst_55 = arith.constant 0.000000e+00 : f32
    %148 = vector.shape_cast %147 : vector<16x16xi1> to vector<1x16x16xi1>
    %149 = vector.shape_cast %144 : vector<1x16x1xf32> to vector<1x16x1xf32>
    %150 = vector.broadcast %149 : vector<1x16x1xf32> to vector<1x16x16xf32>
    %151 = vector.broadcast %cst_55 : f32 to vector<1x16x16xf32>
    %152 = arith.select %148, %150, %151 : vector<1x16x16xi1>, vector<1x16x16xf32>
    %153 = arith.cmpi sge, %110, %109 : vector<16x16xi32>
    %154 = arith.extui %153 : vector<16x16xi1> to vector<16x16xi32>
    %155 = arith.sitofp %154 : vector<16x16xi32> to vector<16x16xf32>
    %156 = vector.shape_cast %155 : vector<16x16xf32> to vector<1x16x16xf32>
    "tpu.trace_start"() <{level = 10 : i32, message = "bpk,bkj->bpj"}> : () -> ()
    %cst_56 = arith.constant dense<0.000000e+00> : vector<1x16x16xf32>
    %157 = tpu.matmul %156, %152, %cst_56 {dimension_numbers = #tpu.dot_dimension_numbers<[2], [1], [1], [2], [0, 0, 0, 1, 1, 2], [0], [0]>} : vector<1x16x16xf32>, vector<1x16x16xf32>, vector<1x16x16xf32> -> vector<1x16x16xf32>
    "tpu.trace_stop"() : () -> ()
    %158 = math.exp %157 : vector<1x16x16xf32>
    %159 = arith.cmpi sgt, %110, %109 : vector<16x16xi32>
    %cst_57 = arith.constant 0.000000e+00 : f32
    %160 = vector.shape_cast %159 : vector<16x16xi1> to vector<1x16x16xi1>
    %161 = vector.broadcast %cst_57 : f32 to vector<1x16x16xf32>
    %162 = arith.select %160, %158, %161 : vector<1x16x16xi1>, vector<1x16x16xf32>
    %163 = tpu.transpose %162, [0, 2, 1] : vector<1x16x16xf32> -> vector<1x16x16xf32>
    %164 = arith.addf %162, %163 : vector<1x16x16xf32>
    %165 = arith.cmpi eq, %110, %109 : vector<16x16xi32>
    %cst_58 = arith.constant 1.000000e+00 : f32
    %cst_59 = arith.constant 0.000000e+00 : f32
    %166 = vector.broadcast %cst_58 : f32 to vector<16x16xf32>
    %167 = vector.broadcast %cst_59 : f32 to vector<16x16xf32>
    %168 = arith.select %165, %166, %167 : vector<16x16xi1>, vector<16x16xf32>
    %169 = vector.shape_cast %168 : vector<16x16xf32> to vector<1x16x16xf32>
    %170 = arith.addf %164, %169 : vector<1x16x16xf32>
    %c0_60 = arith.constant 0 : index
    %c0_61 = arith.constant 0 : index
    %c0_62 = arith.constant 0 : index
    %171 = vector.load %arg11[%c0_60, %c0_61, %c0_62] : memref<1x16x16xf32, #tpu.memory_space<vmem>>, vector<1x16x16xf32>
    tpu.vector_store %arg11[%c0_60, %c0_61, %c0_62], %170 {strides = array<i32>} : memref<1x16x16xf32, #tpu.memory_space<vmem>>, vector<1x16x16xf32>,
    return
  }
  func.func @transform_0(%arg0: i32) -> (i32, i32) {
    %c0_i32 = arith.constant 0 : i32
    %c0_i32_0 = arith.constant 0 : i32
    return %arg0, %c0_i32 : i32, i32
  }
  func.func @transform_1(%arg0: i32) -> (i32, i32) {
    %c0_i32 = arith.constant 0 : i32
    %c0_i32_0 = arith.constant 0 : i32
    return %arg0, %c0_i32 : i32, i32
  }
  func.func @transform_2(%arg0: i32) -> (i32, i32, i32) {
    %c0_i32 = arith.constant 0 : i32
    %c0_i32_0 = arith.constant 0 : i32
    %c0_i32_1 = arith.constant 0 : i32
    return %arg0, %c0_i32, %c0_i32_0 : i32, i32, i32
  }
  func.func @transform_3(%arg0: i32) -> (i32, i32) {
    %c0_i32 = arith.constant 0 : i32
    %c0_i32_0 = arith.constant 0 : i32
    return %arg0, %c0_i32 : i32, i32
  }
  func.func @transform_4(%arg0: i32) -> (i32, i32, i32) {
    %c0_i32 = arith.constant 0 : i32
    %c0_i32_0 = arith.constant 0 : i32
    %c0_i32_1 = arith.constant 0 : i32
    return %arg0, %c0_i32, %c0_i32_0 : i32, i32, i32
  }
  func.func @transform_5(%arg0: i32) -> (i32, i32, i32) {
    %c0_i32 = arith.constant 0 : i32
    %c0_i32_0 = arith.constant 0 : i32
    %c0_i32_1 = arith.constant 0 : i32
    return %arg0, %c0_i32, %c0_i32_0 : i32, i32, i32
  }
  func.func @transform_6(%arg0: i32) -> (i32, i32) {
    %c0_i32 = arith.constant 0 : i32
    %c0_i32_0 = arith.constant 0 : i32
    %c0_i32_1 = arith.constant 0 : i32
    return %c0_i32, %c0_i32_0 : i32, i32
  }
  func.func @transform_7(%arg0: i32) -> (i32, i32) {
    %c0_i32 = arith.constant 0 : i32
    %c0_i32_0 = arith.constant 0 : i32
    %c0_i32_1 = arith.constant 0 : i32
    return %c0_i32, %c0_i32_0 : i32, i32
  }
  func.func @transform_8(%arg0: i32) -> (i32, i32) {
    %c0_i32 = arith.constant 0 : i32
    %c0_i32_0 = arith.constant 0 : i32
    %c0_i32_1 = arith.constant 0 : i32
    return %c0_i32, %c0_i32_0 : i32, i32
  }
  func.func @transform_9(%arg0: i32) -> (i32, i32) {
    %c0_i32 = arith.constant 0 : i32
    %c0_i32_0 = arith.constant 0 : i32
    %c0_i32_1 = arith.constant 0 : i32
    return %c0_i32, %c0_i32_0 : i32, i32
  }
  func.func @transform_10(%arg0: i32) -> (i32, i32, i32) {
    %c0_i32 = arith.constant 0 : i32
    %c0_i32_0 = arith.constant 0 : i32
    %c0_i32_1 = arith.constant 0 : i32
    return %arg0, %c0_i32, %c0_i32_0 : i32, i32, i32
  }
  func.func @transform_11(%arg0: i32) -> (i32, i32, i32) {
    %c0_i32 = arith.constant 0 : i32
    %c0_i32_0 = arith.constant 0 : i32
    %c0_i32_1 = arith.constant 0 : i32
    return %arg0, %c0_i32, %c0_i32_0 : i32, i32, i32
  }
}

</mosaic_0001>

<llo_original>
// kernel: tpu_custom_call.1
$region0: #{tpu_custom_call.1}
  #allocation0 [shape = 'u32[]', space=smem, size = 0x4, offset = 0x4, fixed_abs, tag = 'smem constant byte address 0x4 - core index']
  #allocation1 [shape = 'u32[144,128]{1,0:T(1,128)}', space=vmem, size = 0x12000, scoped, tag = 'internal scratch']
  %s0 = inlined_call_operand.vmem [shape: f32[32,32], index: 0, kind: input, shape index: {}]
  %s1 = inlined_call_operand.vmem [shape: s32[16,1], index: 1, kind: input, shape index: {}]
  %s2 = inlined_call_operand.vmem [shape: s32[2,8,1], index: 2, kind: input, shape index: {}]
  %s3 = inlined_call_operand.vmem [shape: s32[16,2], index: 3, kind: input, shape index: {}]
  %s4 = inlined_call_operand.vmem [shape: s32[2,1,16], index: 4, kind: input, shape index: {}]
  %s5 = inlined_call_operand.vmem [shape: f32[2,16,16], index: 5, kind: input, shape index: {}]
  %s6 = inlined_call_operand.hbm [shape: bf16[32,64], index: 6, kind: input, shape index: {}]
  %s7 = inlined_call_operand.vmem [shape: f32[1,64], index: 7, kind: input, shape index: {}]
  %s8 = inlined_call_operand.vmem [shape: f32[1,32], index: 8, kind: input, shape index: {}]
  %s9 = inlined_call_operand.vmem [shape: f32[1,32], index: 9, kind: input, shape index: {}]
  %s10 = inlined_call_operand.hbm [shape: f32[2,16,16], index: 10, kind: output, shape index: {0}]
  %s11 = inlined_call_operand.hbm [shape: f32[2,16,16], index: 11, kind: output, shape index: {1}]
  %12 = xla_tuple %s10, %s11
  %s13 = sld [smem:[#allocation0]]
  $region85: #{tpu_custom_call.1} parent=0
    _
  %s15 = ssub.s32 1, %s13
  %s16 = scalar_select 0, %s15, %s13
  $region1: #{tpu_custom_call.1} parent=0
    #allocation2 [shape = 'u8[8192]{0}', space=vmem, size = 0x2000, scoped, tag = 'input window, operand 6, single buffered']
    #allocation3 [shape = 's32[2]{0}', space=sflag, size = 0x8, scoped, tag = 'scoped memory for tpu_custom_call.1']
    #allocation4 [shape = 's32[2]{0}', space=sflag, size = 0x8, scoped, tag = 'scoped memory for tpu_custom_call.1']
    #allocation5 [shape = 'u8[16384]{0}', space=vmem, size = 0x4000, scoped, tag = 'output window, operand 0']
    #allocation6 [shape = 'u8[16384]{0}', space=vmem, size = 0x4000, scoped, tag = 'output window, operand 1']
    #allocation7 [shape = 's32[2]{0}', space=sflag, size = 0x8, scoped, tag = 'scoped memory for tpu_custom_call.1']
    %17 = vsyncpa [#allocation3], 0
    %18 = vsyncpa [#allocation4], 0
    %s19 = scalar_lea.sflag [#allocation4], 1
    %20 = vsyncpa %s19, 0
    %21 = vsyncpa [#allocation7], 0
    %s22 = scalar_lea.sflag [#allocation7], 1
    %23 = vsyncpa %s22, 0
    loop: start=0, step=1, limit=4
    $region2: #{tpu_custom_call.1} parent=1 // loop_pre_header
      _
    $region3: #{tpu_custom_call.1} parent=1 // loop_header
      %s25 = sphi 0, %s29
      %p26 = scmp.ge.s32.totalorder %s25, 4
      %s35 = sphi 0, %s37
      %s38 = sphi 0, %s35
      %s39 = sphi 0, %s38
      %s55 = sphi 0, %s39
      %s61 = sphi 0, %s63
      %s64 = sphi 0, %s61
      %s65 = sphi 0, %s64
      %s81 = sphi 0, %s65
      %s87 = sphi 0, %s89
      %s90 = sphi 0, %s87
      %s91 = sphi 0, %s90
      %s107 = sphi 0, %s91
      %s113 = sphi 0, %s115
      %s116 = sphi 0, %s113
      %s117 = sphi 0, %s116
      %s133 = sphi 0, %s117
      %s139 = sphi 0, %s141
      %s142 = sphi 0, %s139
      %s143 = sphi 0, %s142
      %s159 = sphi 0, %s143
      %s165 = sphi 0, %s167
      %s168 = sphi 0, %s165
      %s169 = sphi 0, %s168
      %s185 = sphi 0, %s169
      %s189 = sphi 0, %s189
      %s191 = sphi 0, %s189
      %s192 = sphi 0, %s191
      %s206 = sphi 0, %s192
      %s210 = sphi 0, %s210
      %s212 = sphi 0, %s210
      %s213 = sphi 0, %s212
      %s227 = sphi 0, %s213
      %s231 = sphi 0, %s231
      %s233 = sphi 0, %s231
      %s234 = sphi 0, %s233
      %s248 = sphi 0, %s234
      %s252 = sphi 0, %s252
      %s254 = sphi 0, %s252
      %s255 = sphi 0, %s254
      %s269 = sphi 0, %s255
      %s275 = sphi 0, %s277
      %s278 = sphi 0, %s275
      %s279 = sphi 0, %s278
      %s295 = sphi 0, %s279
      %s301 = sphi 0, %s303
      %s304 = sphi 0, %s301
      %s305 = sphi 0, %s304
      %s321 = sphi 0, %s305
    $region4: #{tpu_custom_call.1} parent=1 // loop_header_branch
      %28 = sbr.rel (%p26) target = $region8
    $region5: #{tpu_custom_call.1} parent=1 // loop_body
      %s30 = ssub.s32 %s25, 1
      %s31 = ssub.s32 %s25, 2
      %s32 = sadd.s32 %s25, 1
      %s33 = ssub.s32 %s25, %s32
      %p34 = scmp.eq.s32.totalorder %s33, 0
      %s36 = sadd.s32 %s35, 1
      %s37 = scalar_select %p34, %s35, %s36
      %p40 = pneg %p34
      %p41 = scmp.eq.s32.totalorder %s25, 1
      %p42 = por %p40, %p41
      %p43 = scmp.ne.s32.totalorder %s35, %s38
      %p44 = scmp.eq.s32.totalorder %s25, 0
      %p45 = por %p43, %p44
      %p46 = scmp.ne.s32.totalorder %s35, %s38
      %p47 = scmp.eq.s32.totalorder %s30, 1
      %p48 = por %p46, %p47
      %p49 = scmp.ne.s32.totalorder %s38, %s39
      %p50 = scmp.eq.s32.totalorder %s30, 0
      %p51 = por %p49, %p50
      %p52 = scmp.ne.s32.totalorder %s38, %s39
      %p53 = scmp.eq.s32.totalorder %s31, 1
      %p54 = por %p52, %p53
      %p56 = scmp.ne.s32.totalorder %s39, %s55
      %p57 = scmp.eq.s32.totalorder %s31, 0
      %p58 = por %p56, %p57
      %s59 = ssub.s32 %s25, %s32
      %p60 = scmp.eq.s32.totalorder %s59, 0
      %s62 = sadd.s32 %s61, 1
      %s63 = scalar_select %p60, %s61, %s62
      %p66 = pneg %p60
      %p67 = scmp.eq.s32.totalorder %s25, 1
      %p68 = por %p66, %p67
      %p69 = scmp.ne.s32.totalorder %s61, %s64
      %p70 = scmp.eq.s32.totalorder %s25, 0
      %p71 = por %p69, %p70
      %p72 = scmp.ne.s32.totalorder %s61, %s64
      %p73 = scmp.eq.s32.totalorder %s30, 1
      %p74 = por %p72, %p73
      %p75 = scmp.ne.s32.totalorder %s64, %s65
      %p76 = scmp.eq.s32.totalorder %s30, 0
      %p77 = por %p75, %p76
      %p78 = scmp.ne.s32.totalorder %s64, %s65
      %p79 = scmp.eq.s32.totalorder %s31, 1
      %p80 = por %p78, %p79
      %p82 = scmp.ne.s32.totalorder %s65, %s81
      %p83 = scmp.eq.s32.totalorder %s31, 0
      %p84 = por %p82, %p83
      %s85 = ssub.s32 %s25, %s32
      %p86 = scmp.eq.s32.totalorder %s85, 0
      %s88 = sadd.s32 %s87, 1
      %s89 = scalar_select %p86, %s87, %s88
      %p92 = pneg %p86
      %p93 = scmp.eq.s32.totalorder %s25, 1
      %p94 = por %p92, %p93
      %p95 = scmp.ne.s32.totalorder %s87, %s90
      %p96 = scmp.eq.s32.totalorder %s25, 0
      %p97 = por %p95, %p96
      %p98 = scmp.ne.s32.totalorder %s87, %s90
      %p99 = scmp.eq.s32.totalorder %s30, 1
      %p100 = por %p98, %p99
      %p101 = scmp.ne.s32.totalorder %s90, %s91
      %p102 = scmp.eq.s32.totalorder %s30, 0
      %p103 = por %p101, %p102
      %p104 = scmp.ne.s32.totalorder %s90, %s91
      %p105 = scmp.eq.s32.totalorder %s31, 1
      %p106 = por %p104, %p105
      %p108 = scmp.ne.s32.totalorder %s91, %s107
      %p109 = scmp.eq.s32.totalorder %s31, 0
      %p110 = por %p108, %p109
      %s111 = ssub.s32 %s25, %s32
      %p112 = scmp.eq.s32.totalorder %s111, 0
      %s114 = sadd.s32 %s113, 1
      %s115 = scalar_select %p112, %s113, %s114
      %p118 = pneg %p112
      %p119 = scmp.eq.s32.totalorder %s25, 1
      %p120 = por %p118, %p119
      %p121 = scmp.ne.s32.totalorder %s113, %s116
      %p122 = scmp.eq.s32.totalorder %s25, 0
      %p123 = por %p121, %p122
      %p124 = scmp.ne.s32.totalorder %s113, %s116
      %p125 = scmp.eq.s32.totalorder %s30, 1
      %p126 = por %p124, %p125
      %p127 = scmp.ne.s32.totalorder %s116, %s117
      %p128 = scmp.eq.s32.totalorder %s30, 0
      %p129 = por %p127, %p128
      %p130 = scmp.ne.s32.totalorder %s116, %s117
      %p131 = scmp.eq.s32.totalorder %s31, 1
      %p132 = por %p130, %p131
      %p134 = scmp.ne.s32.totalorder %s117, %s133
      %p135 = scmp.eq.s32.totalorder %s31, 0
      %p136 = por %p134, %p135
      %s137 = ssub.s32 %s25, %s32
      %p138 = scmp.eq.s32.totalorder %s137, 0
      %s140 = sadd.s32 %s139, 1
      %s141 = scalar_select %p138, %s139, %s140
      %p144 = pneg %p138
      %p145 = scmp.eq.s32.totalorder %s25, 1
      %p146 = por %p144, %p145
      %p147 = scmp.ne.s32.totalorder %s139, %s142
      %p148 = scmp.eq.s32.totalorder %s25, 0
      %p149 = por %p147, %p148
      %p150 = scmp.ne.s32.totalorder %s139, %s142
      %p151 = scmp.eq.s32.totalorder %s30, 1
      %p152 = por %p150, %p151
      %p153 = scmp.ne.s32.totalorder %s142, %s143
      %p154 = scmp.eq.s32.totalorder %s30, 0
      %p155 = por %p153, %p154
      %p156 = scmp.ne.s32.totalorder %s142, %s143
      %p157 = scmp.eq.s32.totalorder %s31, 1
      %p158 = por %p156, %p157
      %p160 = scmp.ne.s32.totalorder %s143, %s159
      %p161 = scmp.eq.s32.totalorder %s31, 0
      %p162 = por %p160, %p161
      %s163 = ssub.s32 %s25, %s32
      %p164 = scmp.eq.s32.totalorder %s163, 0
      %s166 = sadd.s32 %s165, 1
      %s167 = scalar_select %p164, %s165, %s166
      %p170 = pneg %p164
      %p171 = scmp.eq.s32.totalorder %s25, 1
      %p172 = por %p170, %p171
      %p173 = scmp.ne.s32.totalorder %s165, %s168
      %p174 = scmp.eq.s32.totalorder %s25, 0
      %p175 = por %p173, %p174
      %p176 = scmp.ne.s32.totalorder %s165, %s168
      %p177 = scmp.eq.s32.totalorder %s30, 1
      %p178 = por %p176, %p177
      %p179 = scmp.ne.s32.totalorder %s168, %s169
      %p180 = scmp.eq.s32.totalorder %s30, 0
      %p181 = por %p179, %p180
      %p182 = scmp.ne.s32.totalorder %s168, %s169
      %p183 = scmp.eq.s32.totalorder %s31, 1
      %p184 = por %p182, %p183
      %p186 = scmp.ne.s32.totalorder %s169, %s185
      %p187 = scmp.eq.s32.totalorder %s31, 0
      %p188 = por %p186, %p187
      %s190 = sadd.s32 %s189, 1
      %p193 = scmp.eq.s32.totalorder %s25, 1
      %p194 = scmp.ne.s32.totalorder %s189, %s191
      %p195 = scmp.eq.s32.totalorder %s25, 0
      %p196 = por %p194, %p195
      %p197 = scmp.ne.s32.totalorder %s189, %s191
      %p198 = scmp.eq.s32.totalorder %s30, 1
      %p199 = por %p197, %p198
      %p200 = scmp.ne.s32.totalorder %s191, %s192
      %p201 = scmp.eq.s32.totalorder %s30, 0
      %p202 = por %p200, %p201
      %p203 = scmp.ne.s32.totalorder %s191, %s192
      %p204 = scmp.eq.s32.totalorder %s31, 1
      %p205 = por %p203, %p204
      %p207 = scmp.ne.s32.totalorder %s192, %s206
      %p208 = scmp.eq.s32.totalorder %s31, 0
      %p209 = por %p207, %p208
      %s211 = sadd.s32 %s210, 1
      %p214 = scmp.eq.s32.totalorder %s25, 1
      %p215 = scmp.ne.s32.totalorder %s210, %s212
      %p216 = scmp.eq.s32.totalorder %s25, 0
      %p217 = por %p215, %p216
      %p218 = scmp.ne.s32.totalorder %s210, %s212
      %p219 = scmp.eq.s32.totalorder %s30, 1
      %p220 = por %p218, %p219
      %p221 = scmp.ne.s32.totalorder %s212, %s213
      %p222 = scmp.eq.s32.totalorder %s30, 0
      %p223 = por %p221, %p222
      %p224 = scmp.ne.s32.totalorder %s212, %s213
      %p225 = scmp.eq.s32.totalorder %s31, 1
      %p226 = por %p224, %p225
      %p228 = scmp.ne.s32.totalorder %s213, %s227
      %p229 = scmp.eq.s32.totalorder %s31, 0
      %p230 = por %p228, %p229
      %s232 = sadd.s32 %s231, 1
      %p235 = scmp.eq.s32.totalorder %s25, 1
      %p236 = scmp.ne.s32.totalorder %s231, %s233
      %p237 = scmp.eq.s32.totalorder %s25, 0
      %p238 = por %p236, %p237
      %p239 = scmp.ne.s32.totalorder %s231, %s233
      %p240 = scmp.eq.s32.totalorder %s30, 1
      %p241 = por %p239, %p240
      %p242 = scmp.ne.s32.totalorder %s233, %s234
      %p243 = scmp.eq.s32.totalorder %s30, 0
      %p244 = por %p242, %p243
      %p245 = scmp.ne.s32.totalorder %s233, %s234
      %p246 = scmp.eq.s32.totalorder %s31, 1
      %p247 = por %p245, %p246
      %p249 = scmp.ne.s32.totalorder %s234, %s248
      %p250 = scmp.eq.s32.totalorder %s31, 0
      %p251 = por %p249, %p250
      %s253 = sadd.s32 %s252, 1
      %p256 = scmp.eq.s32.totalorder %s25, 1
      %p257 = scmp.ne.s32.totalorder %s252, %s254
      %p258 = scmp.eq.s32.totalorder %s25, 0
      %p259 = por %p257, %p258
      %p260 = scmp.ne.s32.totalorder %s252, %s254
      %p261 = scmp.eq.s32.totalorder %s30, 1
      %p262 = por %p260, %p261
      %p263 = scmp.ne.s32.totalorder %s254, %s255
      %p264 = scmp.eq.s32.totalorder %s30, 0
      %p265 = por %p263, %p264
      %p266 = scmp.ne.s32.totalorder %s254, %s255
      %p267 = scmp.eq.s32.totalorder %s31, 1
      %p268 = por %p266, %p267
      %p270 = scmp.ne.s32.totalorder %s255, %s269
      %p271 = scmp.eq.s32.totalorder %s31, 0
      %p272 = por %p270, %p271
      %s273 = ssub.s32 %s25, %s32
      %p274 = scmp.eq.s32.totalorder %s273, 0
      %s276 = sadd.s32 %s275, 1
      %s277 = scalar_select %p274, %s275, %s276
      %p280 = pneg %p274
      %p281 = scmp.eq.s32.totalorder %s25, 1
      %p282 = por %p280, %p281
      %p283 = scmp.ne.s32.totalorder %s275, %s278
      %p284 = scmp.eq.s32.totalorder %s25, 0
      %p285 = por %p283, %p284
      %p286 = scmp.ne.s32.totalorder %s275, %s278
      %p287 = scmp.eq.s32.totalorder %s30, 1
      %p288 = por %p286, %p287
      %p289 = scmp.ne.s32.totalorder %s278, %s279
      %p290 = scmp.eq.s32.totalorder %s30, 0
      %p291 = por %p289, %p290
      %p292 = scmp.ne.s32.totalorder %s278, %s279
      %p293 = scmp.eq.s32.totalorder %s31, 1
      %p294 = por %p292, %p293
      %p296 = scmp.ne.s32.totalorder %s279, %s295
      %p297 = scmp.eq.s32.totalorder %s31, 0
      %p298 = por %p296, %p297
      %s299 = ssub.s32 %s25, %s32
      %p300 = scmp.eq.s32.totalorder %s299, 0
      %s302 = sadd.s32 %s301, 1
      %s303 = scalar_select %p300, %s301, %s302
      %p306 = pneg %p300
      %p307 = scmp.eq.s32.totalorder %s25, 1
      %p308 = por %p306, %p307
      %p309 = scmp.ne.s32.totalorder %s301, %s304
      %p310 = scmp.eq.s32.totalorder %s25, 0
      %p311 = por %p309, %p310
      %p312 = scmp.ne.s32.totalorder %s301, %s304
      %p313 = scmp.eq.s32.totalorder %s30, 1
      %p314 = por %p312, %p313
      %p315 = scmp.ne.s32.totalorder %s304, %s305
      %p316 = scmp.eq.s32.totalorder %s30, 0
      %p317 = por %p315, %p316
      %p318 = scmp.ne.s32.totalorder %s304, %s305
      %p319 = scmp.eq.s32.totalorder %s31, 1
      %p320 = por %p318, %p319
      %p322 = scmp.ne.s32.totalorder %s305, %s321
      %p323 = scmp.eq.s32.totalorder %s31, 0
      %p324 = por %p322, %p323
      %p325 = scmp.le.s32.totalorder 1, %s25
      %p326 = scmp.lt.s32.totalorder %s25, 3
      %p327 = pnand %p325, %p326
      %p328 = pneg %p327
      // Predicated region
      $region9: #{tpu_custom_call.1} parent=5 // pred_check
        _
      $region10: #{tpu_custom_call.1} parent=5 // pred_check_branch
        %330 = sbr.rel (%p327) target = $region12
      $region11: #{tpu_custom_call.1} parent=5 // pred_region
        %s331 = ssub.s32 %s25, 1
        // Predicated region
        $region13: #{tpu_custom_call.1} parent=11 // pred_check
          %p332 = pneg %p202
        $region14: #{tpu_custom_call.1} parent=11 // pred_check_branch
          %334 = sbr.rel (%p332) target = $region16
        $region15: #{tpu_custom_call.1} parent=11 // pred_region
          %s336 = ssub.s32 256, 256
          %337 = vsyncadd [#allocation3], %s336
          %s338 = sshll.u32 [#allocation2], 4
          %s339 = int_to_ptr.vmem [resolvable:$true] %s338
          %344 = dma.hbm_to_vmem [thread:$0]  %s6, 256, %s339, [#allocation3], 64, 64, 4
        $region16: #{tpu_custom_call.1} parent=11 // pred_fallthru
          _
        // Predicated region
        $region17: #{tpu_custom_call.1} parent=11 // pred_check
          %p345 = pneg %p223
        $region18: #{tpu_custom_call.1} parent=11 // pred_check_branch
          %347 = sbr.rel (%p345) target = $region20
        $region19: #{tpu_custom_call.1} parent=11 // pred_region
          _
        $region20: #{tpu_custom_call.1} parent=11 // pred_fallthru
          _
        // Predicated region
        $region21: #{tpu_custom_call.1} parent=11 // pred_check
          %p348 = pneg %p244
        $region22: #{tpu_custom_call.1} parent=11 // pred_check_branch
          %350 = sbr.rel (%p348) target = $region24
        $region23: #{tpu_custom_call.1} parent=11 // pred_region
          _
        $region24: #{tpu_custom_call.1} parent=11 // pred_fallthru
          _
        // Predicated region
        $region25: #{tpu_custom_call.1} parent=11 // pred_check
          %p351 = pneg %p265
        $region26: #{tpu_custom_call.1} parent=11 // pred_check_branch
          %353 = sbr.rel (%p351) target = $region28
        $region27: #{tpu_custom_call.1} parent=11 // pred_region
          _
        $region28: #{tpu_custom_call.1} parent=11 // pred_fallthru
          _
      $region12: #{tpu_custom_call.1} parent=5 // pred_fallthru
        _
      %p354 = scmp.lt.s32.totalorder %s25, 2
      // Predicated region
      $region29: #{tpu_custom_call.1} parent=5 // pred_check
        %p355 = pneg %p354
      $region30: #{tpu_custom_call.1} parent=5 // pred_check_branch
        %357 = sbr.rel (%p355) target = $region32
      $region31: #{tpu_custom_call.1} parent=5 // pred_region
        // Predicated region
        $region33: #{tpu_custom_call.1} parent=31 // pred_check
          %p358 = pneg %p45
        $region34: #{tpu_custom_call.1} parent=31 // pred_check_branch
          %360 = sbr.rel (%p358) target = $region36
        $region35: #{tpu_custom_call.1} parent=31 // pred_region
          %s361 = smul.u32 2, %s25
          %p362 = scmp.lt.s32.totalorder %s361, 3
          %s363 = scalar_select %p362, %s361, 3
          %s364 = smul.addr %s363, 8
          %s365 = scalar_lea.vmem %s0, %s364
          %s366 = smul.u32 2, %s25
        $region36: #{tpu_custom_call.1} parent=31 // pred_fallthru
          _
        // Predicated region
        $region37: #{tpu_custom_call.1} parent=31 // pred_check
          %p367 = pneg %p71
        $region38: #{tpu_custom_call.1} parent=31 // pred_check_branch
          %369 = sbr.rel (%p367) target = $region40
        $region39: #{tpu_custom_call.1} parent=31 // pred_region
          %p370 = scmp.lt.s32.totalorder %s25, 1
          %s371 = scalar_select %p370, %s25, 1
          %s372 = smul.addr %s371, 8
          %s373 = scalar_lea.vmem %s1, %s372
        $region40: #{tpu_custom_call.1} parent=31 // pred_fallthru
          _
        // Predicated region
        $region41: #{tpu_custom_call.1} parent=31 // pred_check
          %p374 = pneg %p97
        $region42: #{tpu_custom_call.1} parent=31 // pred_check_branch
          %376 = sbr.rel (%p374) target = $region44
        $region43: #{tpu_custom_call.1} parent=31 // pred_region
          %p377 = scmp.lt.s32.totalorder %s25, 1
          %s378 = scalar_select %p377, %s25, 1
          %s379 = smul.addr %s378, 8
          %s380 = scalar_lea.vmem %s2, %s379
        $region44: #{tpu_custom_call.1} parent=31 // pred_fallthru
          _
        // Predicated region
        $region45: #{tpu_custom_call.1} parent=31 // pred_check
          %p381 = pneg %p123
        $region46: #{tpu_custom_call.1} parent=31 // pred_check_branch
          %383 = sbr.rel (%p381) target = $region48
        $region47: #{tpu_custom_call.1} parent=31 // pred_region
          %p384 = scmp.lt.s32.totalorder %s25, 1
          %s385 = scalar_select %p384, %s25, 1
          %s386 = smul.addr %s385, 8
          %s387 = scalar_lea.vmem %s3, %s386
        $region48: #{tpu_custom_call.1} parent=31 // pred_fallthru
          _
        // Predicated region
        $region49: #{tpu_custom_call.1} parent=31 // pred_check
          %p388 = pneg %p149
        $region50: #{tpu_custom_call.1} parent=31 // pred_check_branch
          %390 = sbr.rel (%p388) target = $region52
        $region51: #{tpu_custom_call.1} parent=31 // pred_region
          %p391 = scmp.lt.s32.totalorder %s25, 1
          %s392 = scalar_select %p391, %s25, 1
          %s393 = scalar_lea.vmem %s4, %s392
        $region52: #{tpu_custom_call.1} parent=31 // pred_fallthru
          _
        // Predicated region
        $region53: #{tpu_custom_call.1} parent=31 // pred_check
          %p394 = pneg %p175
        $region54: #{tpu_custom_call.1} parent=31 // pred_check_branch
          %396 = sbr.rel (%p394) target = $region56
        $region55: #{tpu_custom_call.1} parent=31 // pred_region
          %p397 = scmp.lt.s32.totalorder %s25, 1
          %s398 = scalar_select %p397, %s25, 1
          %s399 = smul.addr %s398, 2
          %s400 = smul.addr %s399, 8
          %s401 = scalar_lea.vmem %s5, %s400
        $region56: #{tpu_custom_call.1} parent=31 // pred_fallthru
          _
      $region32: #{tpu_custom_call.1} parent=5 // pred_fallthru
        _
      %p402 = scmp.le.s32.totalorder 1, %s25
      %p403 = scmp.lt.s32.totalorder %s25, 3
      %p404 = pnand %p402, %p403
      %p405 = pneg %p404
      // Predicated region
      $region57: #{tpu_custom_call.1} parent=5 // pred_check
        _
      $region58: #{tpu_custom_call.1} parent=5 // pred_check_branch
        %407 = sbr.rel (%p404) target = $region60
      $region59: #{tpu_custom_call.1} parent=5 // pred_region
        %s408 = ssub.s32 %s25, 1
        // Predicated region
        $region61: #{tpu_custom_call.1} parent=59 // pred_check
          %p409 = pneg %p202
        $region62: #{tpu_custom_call.1} parent=59 // pred_check_branch
          %411 = sbr.rel (%p409) target = $region64
        $region63: #{tpu_custom_call.1} parent=59 // pred_region
          %412 = dma.done [#allocation3], 256
        $region64: #{tpu_custom_call.1} parent=59 // pred_fallthru
          _
        %s413 = smul.u32 2, %s30
        %p414 = scmp.lt.s32.totalorder %s413, 3
        %s415 = scalar_select %p414, %s413, 3
        %s416 = smul.addr %s415, 8
        %s417 = scalar_lea.vmem %s0, %s416
        %p418 = pneg %p51
        %p419 = pneg %p48
        %p420 = scmp.lt.s32.totalorder %s30, 1
        %s421 = scalar_select %p420, %s30, 1
        %s422 = smul.addr %s421, 8
        %s423 = scalar_lea.vmem %s1, %s422
        %p424 = pneg %p77
        %p425 = pneg %p74
        %p426 = scmp.lt.s32.totalorder %s30, 1
        %s427 = scalar_select %p426, %s30, 1
        %s428 = smul.addr %s427, 8
        %s429 = scalar_lea.vmem %s2, %s428
        %p430 = pneg %p103
        %p431 = pneg %p100
        %p432 = scmp.lt.s32.totalorder %s30, 1
        %s433 = scalar_select %p432, %s30, 1
        %s434 = smul.addr %s433, 8
        %s435 = scalar_lea.vmem %s3, %s434
        %p436 = pneg %p129
        %p437 = pneg %p126
        %p438 = scmp.lt.s32.totalorder %s30, 1
        %s439 = scalar_select %p438, %s30, 1
        %s440 = scalar_lea.vmem %s4, %s439
        %p441 = pneg %p155
        %p442 = pneg %p152
        %p443 = scmp.lt.s32.totalorder %s30, 1
        %s444 = scalar_select %p443, %s30, 1
        %s445 = smul.addr %s444, 2
        %s446 = smul.addr %s445, 8
        %s447 = scalar_lea.vmem %s5, %s446
        %p448 = pneg %p181
        %p449 = pneg %p178
        %p450 = pneg %p202
        %p451 = pneg %p199
        %p452 = pneg %p223
        %p453 = pneg %p220
        %p454 = pneg %p244
        %p455 = pneg %p241
        %p456 = pneg %p265
        %p457 = pneg %p262
        %p458 = pneg %p291
        %p459 = pneg %p288
        %s460 = sand.u32 %s278, 1
        %s461 = scalar_lea.sflag [#allocation4], %s460
        %s462 = sand.u32 %s278, 1
        %s463 = smul.addr %s462, 16
        %s464 = scalar_lea.vmem [#allocation5], %s463
        %p465 = pneg %p317
        %p466 = pneg %p314
        %s467 = sand.u32 %s304, 1
        %s468 = scalar_lea.sflag [#allocation7], %s467
        %s469 = sand.u32 %s304, 1
        %s470 = smul.addr %s469, 16
        %s471 = scalar_lea.vmem [#allocation6], %s470
        %s472 = smul.u32 2, %s30
        %p473 = scmp.lt.s32.totalorder %s472, 3
        %s474 = scalar_select %p473, %s472, 3
        %s475 = smul.addr %s474, 8
        %s476 = scalar_lea.vmem %s0, %s475
        %s477 = smul.u32 2, %s30
        %p478 = scmp.lt.s32.totalorder %s30, 1
        %s479 = scalar_select %p478, %s30, 1
        %s480 = smul.addr %s479, 8
        %s481 = scalar_lea.vmem %s1, %s480
        %p482 = scmp.lt.s32.totalorder %s30, 1
        %s483 = scalar_select %p482, %s30, 1
        %s484 = smul.addr %s483, 8
        %s485 = scalar_lea.vmem %s2, %s484
        %p486 = scmp.lt.s32.totalorder %s30, 1
        %s487 = scalar_select %p486, %s30, 1
        %s488 = smul.addr %s487, 8
        %s489 = scalar_lea.vmem %s3, %s488
        %p490 = scmp.lt.s32.totalorder %s30, 1
        %s491 = scalar_select %p490, %s30, 1
        %s492 = scalar_lea.vmem %s4, %s491
        %p493 = scmp.lt.s32.totalorder %s30, 1
        %s494 = scalar_select %p493, %s30, 1
        %s495 = smul.addr %s494, 2
        %s496 = smul.addr %s495, 8
        %s497 = scalar_lea.vmem %s5, %s496
        %v499 = vld [vmem:[%s476] sm:$0xff]
        %v500 = vld [vmem:[%s476 + $0x8] sm:$0xff]
        %v501 = vld [vmem:[%s481] sm:$0xff]
        %v502 = vlaneseq
        %v503 = vand.u32 %v502, 127
        %504 = vset.pattern.permute.xlu0 0
        %505 = vperm.xlu0 %504, %v501
        %v506 = vpop.permute.xlu0 %505
        %vm507 = vcmp.eq.s32.totalorder %v503, %v506
        %v508 = vsel %vm507, 1, 0
        %v509 = vcvt.s32.f32 %v508
        %vm510 = vcmask 130048
        %v512 = vsel %vm510, %v509, 0
        %514 = vmatprep.subr.mxu0 0.0
        %515 = vmatpush1.msra.mxu0 %v499
        %516 = vmatprep.subr.mxu0 0.0
        %517 = vmatpush1.msra.mxu0 %v500
        %518 = vmatprep.subr.mxu0 0.0
        %519 = vmatpush1.msra.mxu0 0.0
        %520 = vmatprep.subr.mxu0 0.0
        %521 = vmatpush1.msra.mxu0 0.0
        %522 = vmatprep.subr.mxu0 0.0
        %523 = vmatpush1.msra.mxu0 0.0
        %524 = vmatprep.subr.mxu0 0.0
        %525 = vmatpush1.msra.mxu0 0.0
        %526 = vmatprep.subr.mxu0 0.0
        %527 = vmatpush1.msra.mxu0 0.0
        %528 = vmatprep.subr.mxu0 0.0
        %529 = vmatpush1.msra.mxu0 0.0
        %530 = vmatprep.subr.mxu0 0.0
        %531 = vmatpush1.msra.mxu0 0.0
        %532 = vmatprep.subr.mxu0 0.0
        %533 = vmatpush1.msra.mxu0 0.0
        %534 = vmatprep.subr.mxu0 0.0
        %535 = vmatpush1.msra.mxu0 0.0
        %536 = vmatprep.subr.mxu0 0.0
        %537 = vmatpush1.msra.mxu0 0.0
        %538 = vmatprep.subr.mxu0 0.0
        %539 = vmatpush1.msra.mxu0 0.0
        %540 = vmatprep.subr.mxu0 0.0
        %541 = vmatpush1.msra.mxu0 0.0
        %542 = vmatprep.subr.mxu0 0.0
        %543 = vmatpush1.msra.mxu0 0.0
        %544 = vmatprep.subr.mxu0 0.0
        %545 = vmatpush1.msra.mxu0 0.0
        %546 = vmatprep.subr.mxu0 0.0
        %547 = vmatpush1.msra.mxu0 0.0
        %548 = vmatprep.subr.mxu0 0.0
        %549 = vmatpush1.msra.mxu0 0.0
        %550 = vmatprep.subr.mxu0 0.0
        %551 = vmatpush1.msra.mxu0 0.0
        %552 = vmatprep.subr.mxu0 0.0
        %553 = vmatpush1.msra.mxu0 0.0
        %554 = vmatprep.subr.mxu0 0.0
        %555 = vmatpush1.msra.mxu0 0.0
        %556 = vmatprep.subr.mxu0 0.0
        %557 = vmatpush1.msra.mxu0 0.0
        %558 = vmatprep.subr.mxu0 0.0
        %559 = vmatpush1.msra.mxu0 0.0
        %560 = vmatprep.subr.mxu0 0.0
        %561 = vmatpush1.msra.mxu0 0.0
        %562 = vmatprep.subr.mxu0 0.0
        %563 = vmatpush1.msra.mxu0 0.0
        %564 = vmatprep.subr.mxu0 0.0
        %565 = vmatpush1.msra.mxu0 0.0
        %566 = vmatprep.subr.mxu0 0.0
        %567 = vmatpush1.msra.mxu0 0.0
        %568 = vmatprep.subr.mxu0 0.0
        %569 = vmatpush1.msra.mxu0 0.0
        %570 = vmatprep.subr.mxu0 0.0
        %571 = vmatpush1.msra.mxu0 0.0
        %572 = vmatprep.subr.mxu0 0.0
        %573 = vmatpush1.msra.mxu0 0.0
        %574 = vmatprep.subr.mxu0 0.0
        %575 = vmatpush1.msra.mxu0 0.0
        %576 = vmatprep.subr.mxu0 0.0
        %577 = vmatpush1.msra.mxu0 0.0
        %578 = vmatprep.mubr.f32.mxu0 0.0
        %579 = vmatmul.mubr.f32.gmra.mrb[0].mxu0 %v512
        %v580 = vpop.f32.mrb[0].mxu0
        %v581 = vadd.f32 0.0, %v580
        %v582 = vpop.f32.mrb[0].mxu0
        %583 = vdwg.mxu0
        %vm584 = vcmask 261120
        %v585 = vsel %vm584, %v581, 0.0
        %586 = vadd.xlane.f32.xlu0 %v585
        %v587 = vpop.xlane.xlu0 %586
        %v588 = vrcp.pop 32.0
        %v589 = vmul.f32 %v587, %v588
        %v590 = vsub.f32 %v581, %v589
        %v591 = vmul.f32 %v590, %v590
        %v592 = vsel %vm584, %v591, 0.0
        %593 = vadd.xlane.f32.xlu0 %v592
        %v594 = vpop.xlane.xlu0 %593
        %v595 = vmul.f32 %v594, %v588
        %v596 = vadd.f32 %v595, 1e-12
        %v597 = vrsqrt.pop %v596
        %v598 = vmul.f32 %v590, %v597
        %v599 = vld [vmem:[%s8] sm:$0x1]
        %v601 = vlaneseq
        %v602 = vshrl.u32 %v601, 7
        %v603 = vsub.s32 0, %v602
        %v604 = vrot.slane %v599, %v603
        %v606 = vmul.f32 %v598, %v604
        %v607 = vld [vmem:[%s9] sm:$0x1]
        %v609 = vlaneseq
        %v610 = vshrl.u32 %v609, 7
        %v611 = vsub.s32 0, %v610
        %v612 = vrot.slane %v607, %v611
        %v614 = vadd.f32 %v606, %v612
        %v615 = vpack.c.bf16 %v614, %v614
        %v616 = vld [vmem:[#allocation2] sm:$0xf]
        %v617 = vld [vmem:[#allocation2 + $0x4] sm:$0xf]
        %v618 = vld [vmem:[#allocation2 + $0x8] sm:$0xf]
        %v619 = vld [vmem:[#allocation2 + $0xc] sm:$0xf]
        %v620 = vld [vmem:[%s7] sm:$0x1]
        %v622 = vlaneseq
        %v623 = vshrl.u32 %v622, 7
        %v624 = vsub.s32 0, %v623
        %v625 = vrot.slane %v620, %v624
        %v631 = vunpack.c.l.b16 %v616
        %v632 = vunpack.c.l.b16 %v617
        %v633 = vunpack.c.l.b16 %v618
        %v634 = vunpack.c.l.b16 %v619
        %v635 = vpack.c.b16 %v632, %v631
        %v636 = vpack.c.b16 %v634, %v633
        %v640 = vsel %vm584, %v615, 0
        %642 = vmatprep.subr.bf16.mxu0 0
        %643 = vmatpush1.bf16.msra.mxu0 %v635
        %644 = vmatprep.subr.bf16.mxu0 0
        %645 = vmatpush1.bf16.msra.mxu0 %v636
        %646 = vmatprep.subr.bf16.mxu0 0
        %647 = vmatpush1.bf16.msra.mxu0 0
        %648 = vmatprep.subr.bf16.mxu0 0
        %649 = vmatpush1.bf16.msra.mxu0 0
        %650 = vmatprep.subr.bf16.mxu0 0
        %651 = vmatpush1.bf16.msra.mxu0 0
        %652 = vmatprep.subr.bf16.mxu0 0
        %653 = vmatpush1.bf16.msra.mxu0 0
        %654 = vmatprep.subr.bf16.mxu0 0
        %655 = vmatpush1.bf16.msra.mxu0 0
        %656 = vmatprep.subr.bf16.mxu0 0
        %657 = vmatpush1.bf16.msra.mxu0 0
        %658 = vmatprep.subr.bf16.mxu0 0
        %659 = vmatpush1.bf16.msra.mxu0 0
        %660 = vmatprep.subr.bf16.mxu0 0
        %661 = vmatpush1.bf16.msra.mxu0 0
        %662 = vmatprep.subr.bf16.mxu0 0
        %663 = vmatpush1.bf16.msra.mxu0 0
        %664 = vmatprep.subr.bf16.mxu0 0
        %665 = vmatpush1.bf16.msra.mxu0 0
        %666 = vmatprep.subr.bf16.mxu0 0
        %667 = vmatpush1.bf16.msra.mxu0 0
        %668 = vmatprep.subr.bf16.mxu0 0
        %669 = vmatpush1.bf16.msra.mxu0 0
        %670 = vmatprep.subr.bf16.mxu0 0
        %671 = vmatpush1.bf16.msra.mxu0 0
        %672 = vmatprep.subr.bf16.mxu0 0
        %673 = vmatpush1.bf16.msra.mxu0 0
        %674 = vmatprep.mubr.bf16.mxu0 0
        %675 = vmatmul.mubr.bf16.gmra.mrb[0].mxu0 %v640
        %v676 = vpop.f32.mrb[0].mxu0
        %v677 = vadd.f32 %v625, %v676
        %v678 = vpop.f32.mrb[0].mxu0
        %v679 = vpop.f32.mrb[0].mxu0
        %v680 = vpop.f32.mrb[0].mxu0
        %681 = vdwg.mxu0
        %v683 = vrot.slane %v677, 1
        %vm685 = vcmask 1046528
        %v686 = vsel %vm685, %v683, 0.0
        %v687 = vrot.slane %v677, 7
        %688 = vrot.lane.b32.xlu0 %v687, 96
        %v689 = vpop.permute.xlu0 %688
        %vm691 = vcmask 1040384
        %v692 = vsel %vm691, 0.0, %v689
        %694 = vrot.lane.b32.xlu0 %v686, 96
        %v695 = vpop.permute.xlu0 %694
        %v697 = vmul.f32 %v677, %v695
        %v698 = vsel %vm584, %v697, 0.0
        %699 = vadd.xlane.f32.xlu0 %v698
        %v700 = vpop.xlane.xlu0 %699
        %v701 = vmul.f32 %v700, 0.0625
        %v702 = vmul.f32 %v677, %v692
        %v703 = vsel %vm584, %v702, 0.0
        %704 = vadd.xlane.f32.xlu0 %v703
        %v705 = vpop.xlane.xlu0 %704
        %v706 = vmul.f32 %v705, 0.0625
        %v707 = vld [vmem:[%s489] sm:$0xff]
        %vm708 = vcmp.ne.s32.totalorder %v707, 0
        %v709 = vmax.f32 %v701, %v706
        %v710 = vsub.f32 %v701, %v709
        %v711 = vmul.f32 %v710, 1.442695
        %v712 = vpow.pop %v711
        %v713 = vsub.f32 %v706, %v709
        %v714 = vmul.f32 %v713, 1.442695
        %v715 = vpow.pop %v714
        %v716 = vadd.f32 %v712, %v715
        %v717 = vsel %vm708, 1, 0
        %718 = vrot.lane.b32.xlu0 %v717, 127
        %v719 = vpop.permute.xlu0 %718
        %vm720 = vcmp.ne.s32.totalorder %v719, 0
        %vm721 = vmand %vm708, %vm720
        %v722 = vrcp.pop %v716
        %v723 = vmul.f32 %v712, %v722
        %v724 = vsel %vm708, 0.0, 0.125
        %726 = vrot.lane.b32.xlu0 %v724, 127
        %v727 = vpop.permute.xlu0 %726
        %v729 = vsel %vm708, 1.0, %v727
        %v730 = vsel %vm721, %v723, %v729
        %v731 = vmul.f32 %v715, %v722
        %732 = vrot.lane.b32.xlu0 %v724, 1
        %v733 = vpop.permute.xlu0 %732
        %v735 = vsel %vm708, 1.0, %v733
        %737 = vrot.lane.b32.xlu0 %v735, 127
        %v738 = vpop.permute.xlu0 %737
        %v740 = vsel %vm721, %v731, %v738
        %v742 = vrot.slane %v740, 1
        %v744 = vsel %vm685, %v742, 0.0
        %v745 = vmul.f32 %v730, %v744
        %v746 = vadd.f32 %v745, 1e-15
        %v747 = vrsqrt.pop %v746
        %v748 = vmul.f32 %v746, %v747
        %vm749 = vcmp.eq.f32.partialorder %v746, inf
        %v750 = vsel %vm749, %v746, %v748
        %vm751 = vcmp.eq.f32.partialorder %v746, 0.0
        %v752 = vand.u32 %v746, 2147483648
        %v753 = vsel %vm751, %v752, %v750
        %v754 = vld [vmem:[%s485] sm:$0xff]
        %v755 = vlaneseq
        %v756 = vshrl.u32 %v755, 7
        %757 = vset.pattern.permute.xlu0 0
        %758 = vperm.xlu0 %757, %v754
        %v759 = vpop.permute.xlu0 %758
        %vm760 = vcmp.eq.s32.totalorder %v503, %v759
        %vm761 = vcmp.lt.s32.totalorder %v756, 7
        %vm762 = vmand %vm760, %vm761
        %v763 = vsel %vm762, 1, 0
        %v764 = vcvt.s32.f32 %v763
        %766 = vset.pattern.permute.xlu0 0
        %767 = vperm.xlu0 %766, %v753
        %v768 = vpop.permute.xlu0 %767
        %v770 = vmul.f32 %v764, %v768
        %v771 = vsel %vm510, %v770, 0.0
        %v772 = vrot.slane %v771, 4
        %v773 = vadd.f32 %v771, %v772
        %v774 = vrot.slane %v773, 2
        %v775 = vadd.f32 %v773, %v774
        %v776 = vrot.slane %v775, 1
        %v777 = vadd.f32 %v775, %v776
        %v778 = vld [vmem:[%s492] sm:$0x1]
        %v779 = vcvt.s32.f32 %v778
        %vm780 = vcmp.gt.f32.partialorder %v777, 0.0
        %v781 = vsel %vm780, %v777, %v779
        %v782 = vadd.s32 %v756, 8
        %v783 = vadd.s32 %v503, 1
        %vm784 = vcmp.eq.s32.totalorder %v756, %v783
        %vm785 = vcmp.eq.s32.totalorder %v782, %v783
        %v786 = vlaneseq
        %v787 = vshrl.u32 %v786, 7
        %v788 = vsub.s32 0, %v787
        %v789 = vrot.slane %v781, %v788
        %v790 = vsel %vm784, %v789, 0.0
        %v791 = vsel %vm785, %v789, 0.0
        %792 = vxpose.xlu0.b32.start [1/16] %v790, 128
        %793 = vxpose.xlu0.b32.cont [2/16] %v791, 128
        %794 = vxpose.xlu0.b32.cont [3/16] 0.0, 128
        %795 = vxpose.xlu0.b32.cont [4/16] 0.0, 128
        %796 = vxpose.xlu0.b32.cont [5/16] 0.0, 128
        %797 = vxpose.xlu0.b32.cont [6/16] 0.0, 128
        %798 = vxpose.xlu0.b32.cont [7/16] 0.0, 128
        %799 = vxpose.xlu0.b32.cont [8/16] 0.0, 128
        %800 = vxpose.xlu0.b32.cont [9/16] 0.0, 128
        %801 = vxpose.xlu0.b32.cont [10/16] 0.0, 128
        %802 = vxpose.xlu0.b32.cont [11/16] 0.0, 128
        %803 = vxpose.xlu0.b32.cont [12/16] 0.0, 128
        %804 = vxpose.xlu0.b32.cont [13/16] 0.0, 128
        %805 = vxpose.xlu0.b32.cont [14/16] 0.0, 128
        %806 = vxpose.xlu0.b32.cont [15/16] 0.0, 128
        %807 = vxpose.xlu0.b32.end [16/16] 0.0, 128
        %v808 = vpop.trf.xlu0
        %v809 = vpop.trf.xlu0
        %v810 = vpop.trf.xlu0
        %v811 = vpop.trf.xlu0
        %v812 = vpop.trf.xlu0
        %v813 = vpop.trf.xlu0
        %v814 = vpop.trf.xlu0
        %v815 = vpop.trf.xlu0
        %v816 = vpop.trf.xlu0
        %v817 = vpop.trf.xlu0
        %v818 = vpop.trf.xlu0
        %v819 = vpop.trf.xlu0
        %v820 = vpop.trf.xlu0
        %v821 = vpop.trf.xlu0
        %v822 = vpop.trf.xlu0
        %v823 = vpop.trf.xlu0
        %v824 = vadd.f32 %v790, %v808
        %v825 = vadd.f32 %v791, %v809
        %v826 = vld [vmem:[%s497] sm:$0xff]
        %v827 = vld [vmem:[%s497 + $0x8] sm:$0xff]
        %v828 = vsub.f32 1.0, %v826
        %v829 = vsub.f32 1.0, %v827
        %v830 = vmul.f32 %v828, %v824
        %v831 = vmul.f32 %v829, %v825
        %v832 = vadd.f32 %v826, %v830
        %v833 = vadd.f32 %v827, %v831
        %834 = vst.msk [vmem:[%s471] sm:$0xff] %vm510, %v832
        %835 = vst.msk [vmem:[%s471 + $0x8] sm:$0xff] %vm510, %v833
        %v836 = vadd.s32 %v756, 1
        %v837 = vadd.s32 %v782, 1
        %vm838 = vcmp.eq.s32.totalorder %v503, %v836
        %vm839 = vcmp.eq.s32.totalorder %v503, %v837
        %v840 = vsel %vm838, %v832, 0.0
        %v841 = vsel %vm839, %v833, 0.0
        %v842 = vsel %vm510, %v840, 0.0
        %843 = vadd.xlane.f32.xlu0 %v842
        %v844 = vpop.xlane.xlu0 %843
        %v845 = vsel %vm510, %v841, 0.0
        %846 = vadd.xlane.f32.xlu0 %v845
        %v847 = vpop.xlane.xlu0 %846
        %vm848 = vcmp.lt.s32.totalorder %v756, 15
        %vm849 = vcmp.lt.s32.totalorder %v782, 15
        %v850 = vadd.f32 %v844, 1e-15
        %v851 = vadd.f32 %v847, 1e-15
        %v852 = vlog2.pop %v850
        %v853 = vmul.f32 %v852, 0.6931472
        %v854 = vlog2.pop %v851
        %v855 = vmul.f32 %v854, 0.6931472
        %v856 = vsel %vm848, %v853, 0.0
        %v857 = vsel %vm849, %v855, 0.0
        %vm858 = vcmp.ge.s32.totalorder %v503, %v836
        %vm859 = vcmp.ge.s32.totalorder %v503, %v837
        %v860 = vsel %vm858, %v856, 0.0
        %v861 = vsel %vm859, %v857, 0.0
        %vm862 = vcmp.ge.s32.totalorder %v503, %v756
        %vm863 = vcmp.ge.s32.totalorder %v503, %v782
        %v864 = vsel %vm862, 1, 0
        %v865 = vsel %vm863, 1, 0
        %v866 = vcvt.s32.f32 %v864
        %v867 = vcvt.s32.f32 %v865
        %v869 = vsel %vm510, %v866, 0
        %v872 = vsel %vm510, %v867, 0
        %874 = vmatprep.subr.mxu0 0.0
        %875 = vmatpush1.msra.mxu0 %v860
        %876 = vmatprep.subr.mxu0 0.0
        %877 = vmatpush1.msra.mxu0 %v861
        %878 = vmatprep.subr.mxu0 0.0
        %879 = vmatpush1.msra.mxu0 0.0
        %880 = vmatprep.subr.mxu0 0.0
        %881 = vmatpush1.msra.mxu0 0.0
        %882 = vmatprep.subr.mxu0 0.0
        %883 = vmatpush1.msra.mxu0 0.0
        %884 = vmatprep.subr.mxu0 0.0
        %885 = vmatpush1.msra.mxu0 0.0
        %886 = vmatprep.subr.mxu0 0.0
        %887 = vmatpush1.msra.mxu0 0.0
        %888 = vmatprep.subr.mxu0 0.0
        %889 = vmatpush1.msra.mxu0 0.0
        %890 = vmatprep.subr.mxu0 0.0
        %891 = vmatpush1.msra.mxu0 0.0
        %892 = vmatprep.subr.mxu0 0.0
        %893 = vmatpush1.msra.mxu0 0.0
        %894 = vmatprep.subr.mxu0 0.0
        %895 = vmatpush1.msra.mxu0 0.0
        %896 = vmatprep.subr.mxu0 0.0
        %897 = vmatpush1.msra.mxu0 0.0
        %898 = vmatprep.subr.mxu0 0.0
        %899 = vmatpush1.msra.mxu0 0.0
        %900 = vmatprep.subr.mxu0 0.0
        %901 = vmatpush1.msra.mxu0 0.0
        %902 = vmatprep.subr.mxu0 0.0
        %903 = vmatpush1.msra.mxu0 0.0
        %904 = vmatprep.subr.mxu0 0.0
        %905 = vmatpush1.msra.mxu0 0.0
        %906 = vmatprep.subr.mxu0 0.0
        %907 = vmatpush1.msra.mxu0 0.0
        %908 = vmatprep.subr.mxu0 0.0
        %909 = vmatpush1.msra.mxu0 0.0
        %910 = vmatprep.subr.mxu0 0.0
        %911 = vmatpush1.msra.mxu0 0.0
        %912 = vmatprep.subr.mxu0 0.0
        %913 = vmatpush1.msra.mxu0 0.0
        %914 = vmatprep.subr.mxu0 0.0
        %915 = vmatpush1.msra.mxu0 0.0
        %916 = vmatprep.subr.mxu0 0.0
        %917 = vmatpush1.msra.mxu0 0.0
        %918 = vmatprep.subr.mxu0 0.0
        %919 = vmatpush1.msra.mxu0 0.0
        %920 = vmatprep.subr.mxu0 0.0
        %921 = vmatpush1.msra.mxu0 0.0
        %922 = vmatprep.subr.mxu0 0.0
        %923 = vmatpush1.msra.mxu0 0.0
        %924 = vmatprep.subr.mxu0 0.0
        %925 = vmatpush1.msra.mxu0 0.0
        %926 = vmatprep.subr.mxu0 0.0
        %927 = vmatpush1.msra.mxu0 0.0
        %928 = vmatprep.subr.mxu0 0.0
        %929 = vmatpush1.msra.mxu0 0.0
        %930 = vmatprep.subr.mxu0 0.0
        %931 = vmatpush1.msra.mxu0 0.0
        %932 = vmatprep.subr.mxu0 0.0
        %933 = vmatpush1.msra.mxu0 0.0
        %934 = vmatprep.subr.mxu0 0.0
        %935 = vmatpush1.msra.mxu0 0.0
        %936 = vmatprep.subr.mxu0 0.0
        %937 = vmatpush1.msra.mxu0 0.0
        %938 = vmatprep.mubr.f32.mxu0 0.0
        %939 = vmatmul.mubr.f32.gmra.mrb[0].mxu0 %v869
        %v940 = vpop.f32.mrb[0].mxu0
        %v941 = vadd.f32 0.0, %v940
        %v942 = vpop.f32.mrb[0].mxu0
        %943 = vmatprep.mubr.f32.mxu0 0.0
        %944 = vmatmul.mubr.f32.gmra.mrb[0].mxu0 %v872
        %v945 = vpop.f32.mrb[0].mxu0
        %v946 = vadd.f32 0.0, %v945
        %v947 = vpop.f32.mrb[0].mxu0
        %948 = vdwg.mxu0
        %v949 = vmul.f32 %v941, 1.442695
        %v950 = vpow.pop %v949
        %v951 = vmul.f32 %v946, 1.442695
        %v952 = vpow.pop %v951
        %vm953 = vcmp.gt.s32.totalorder %v503, %v756
        %vm954 = vcmp.gt.s32.totalorder %v503, %v782
        %v955 = vsel %vm953, %v950, 0.0
        %v956 = vsel %vm954, %v952, 0.0
        %957 = vxpose.xlu0.b32.start [1/16] %v955, 128
        %958 = vxpose.xlu0.b32.cont [2/16] %v956, 128
        %959 = vxpose.xlu0.b32.cont [3/16] 0.0, 128
        %960 = vxpose.xlu0.b32.cont [4/16] 0.0, 128
        %961 = vxpose.xlu0.b32.cont [5/16] 0.0, 128
        %962 = vxpose.xlu0.b32.cont [6/16] 0.0, 128
        %963 = vxpose.xlu0.b32.cont [7/16] 0.0, 128
        %964 = vxpose.xlu0.b32.cont [8/16] 0.0, 128
        %965 = vxpose.xlu0.b32.cont [9/16] 0.0, 128
        %966 = vxpose.xlu0.b32.cont [10/16] 0.0, 128
        %967 = vxpose.xlu0.b32.cont [11/16] 0.0, 128
        %968 = vxpose.xlu0.b32.cont [12/16] 0.0, 128
        %969 = vxpose.xlu0.b32.cont [13/16] 0.0, 128
        %970 = vxpose.xlu0.b32.cont [14/16] 0.0, 128
        %971 = vxpose.xlu0.b32.cont [15/16] 0.0, 128
        %972 = vxpose.xlu0.b32.end [16/16] 0.0, 128
        %v973 = vpop.trf.xlu0
        %v974 = vpop.trf.xlu0
        %v975 = vpop.trf.xlu0
        %v976 = vpop.trf.xlu0
        %v977 = vpop.trf.xlu0
        %v978 = vpop.trf.xlu0
        %v979 = vpop.trf.xlu0
        %v980 = vpop.trf.xlu0
        %v981 = vpop.trf.xlu0
        %v982 = vpop.trf.xlu0
        %v983 = vpop.trf.xlu0
        %v984 = vpop.trf.xlu0
        %v985 = vpop.trf.xlu0
        %v986 = vpop.trf.xlu0
        %v987 = vpop.trf.xlu0
        %v988 = vpop.trf.xlu0
        %v989 = vadd.f32 %v955, %v973
        %v990 = vadd.f32 %v956, %v974
        %vm991 = vcmp.eq.s32.totalorder %v503, %v756
        %vm992 = vcmp.eq.s32.totalorder %v503, %v782
        %v993 = vsel %vm991, 1.0, 0.0
        %v994 = vsel %vm992, 1.0, 0.0
        %v995 = vadd.f32 %v989, %v993
        %v996 = vadd.f32 %v990, %v994
        %997 = vst.msk [vmem:[%s464] sm:$0xff] %vm510, %v995
        %998 = vst.msk [vmem:[%s464 + $0x8] sm:$0xff] %vm510, %v996
        %s999 = sand.u32 %s278, 1
        %s1000 = scalar_lea.sflag [#allocation4], %s999
        %s1001 = sand.u32 %s278, 1
        %s1002 = smul.addr %s1001, 16
        %s1003 = scalar_lea.vmem [#allocation5], %s1002
        %s1004 = sand.u32 %s304, 1
        %s1005 = scalar_lea.sflag [#allocation7], %s1004
        %s1006 = sand.u32 %s304, 1
        %s1007 = smul.addr %s1006, 16
        %s1008 = scalar_lea.vmem [#allocation6], %s1007
        // Predicated region
        $region65: #{tpu_custom_call.1} parent=59 // pred_check
          %p1009 = pneg %p288
        $region66: #{tpu_custom_call.1} parent=59 // pred_check_branch
          %1011 = sbr.rel (%p1009) target = $region68
        $region67: #{tpu_custom_call.1} parent=59 // pred_region
          %s1013 = ssub.s32 256, 256
          %1014 = vsyncadd %s1000, %s1013
          %s1015 = smul.addr %s30, 2
          %s1016 = smul.addr %s1015, 128
          %s1017 = scalar_lea.hbm %s10, %s1016
          %s1018 = sshll.u32 %s1003, 4
          %s1019 = int_to_ptr.vmem [resolvable:$true] %s1018
          %1024 = dma.vmem_to_hbm [thread:$0]  %s1019, 256, %s1017, %s1000, 128, 128, 8
        $region68: #{tpu_custom_call.1} parent=59 // pred_fallthru
          _
        // Predicated region
        $region69: #{tpu_custom_call.1} parent=59 // pred_check
          %p1025 = pneg %p314
        $region70: #{tpu_custom_call.1} parent=59 // pred_check_branch
          %1027 = sbr.rel (%p1025) target = $region72
        $region71: #{tpu_custom_call.1} parent=59 // pred_region
          %s1029 = ssub.s32 256, 256
          %1030 = vsyncadd %s1005, %s1029
          %s1031 = smul.addr %s30, 2
          %s1032 = smul.addr %s1031, 128
          %s1033 = scalar_lea.hbm %s11, %s1032
          %s1034 = sshll.u32 %s1008, 4
          %s1035 = int_to_ptr.vmem [resolvable:$true] %s1034
          %1040 = dma.vmem_to_hbm [thread:$0]  %s1035, 256, %s1033, %s1005, 128, 128, 8
        $region72: #{tpu_custom_call.1} parent=59 // pred_fallthru
          _
      $region60: #{tpu_custom_call.1} parent=5 // pred_fallthru
        _
      %p1041 = scmp.le.s32.totalorder 2, %s25
      // Predicated region
      $region73: #{tpu_custom_call.1} parent=5 // pred_check
        %p1042 = pneg %p1041
      $region74: #{tpu_custom_call.1} parent=5 // pred_check_branch
        %1044 = sbr.rel (%p1042) target = $region76
      $region75: #{tpu_custom_call.1} parent=5 // pred_region
        %s1045 = ssub.s32 %s25, 2
        // Predicated region
        $region77: #{tpu_custom_call.1} parent=75 // pred_check
          %p1046 = pneg %p294
        $region78: #{tpu_custom_call.1} parent=75 // pred_check_branch
          %1048 = sbr.rel (%p1046) target = $region80
        $region79: #{tpu_custom_call.1} parent=75 // pred_region
          %s1049 = sand.u32 %s279, 1
          %s1050 = scalar_lea.sflag [#allocation4], %s1049
          %s1051 = sand.u32 %s279, 1
          %s1052 = smul.addr %s1051, 16
          %s1053 = scalar_lea.vmem [#allocation5], %s1052
          %1054 = dma.done %s1050, 256
        $region80: #{tpu_custom_call.1} parent=75 // pred_fallthru
          _
        // Predicated region
        $region81: #{tpu_custom_call.1} parent=75 // pred_check
          %p1055 = pneg %p320
        $region82: #{tpu_custom_call.1} parent=75 // pred_check_branch
          %1057 = sbr.rel (%p1055) target = $region84
        $region83: #{tpu_custom_call.1} parent=75 // pred_region
          %s1058 = sand.u32 %s305, 1
          %s1059 = scalar_lea.sflag [#allocation7], %s1058
          %s1060 = sand.u32 %s305, 1
          %s1061 = smul.addr %s1060, 16
          %s1062 = scalar_lea.vmem [#allocation6], %s1061
          %1063 = dma.done %s1059, 256
        $region84: #{tpu_custom_call.1} parent=75 // pred_fallthru
          _
      $region76: #{tpu_custom_call.1} parent=5 // pred_fallthru
        _
    $region6: #{tpu_custom_call.1} parent=1 // loop_footer
      %s29 = sadd.s32 1, %s25
    $region7: #{tpu_custom_call.1} parent=1 // loop_footer_branch
      %24 = sbr.rel target = $region3
    $region8: #{tpu_custom_call.1} parent=1 // loop_exit
      _
    %1064 = vsyncpa [#allocation3], 1
    %s1065 = scalar_lea.sflag [#allocation3], 1
    %1066 = vsyncpa %s1065, 1
    %1067 = vsyncpa [#allocation4], 1
    %s1068 = scalar_lea.sflag [#allocation4], 1
    %1069 = vsyncpa %s1068, 1
    %1070 = vsyncpa [#allocation7], 1
    %s1071 = scalar_lea.sflag [#allocation7], 1
    %1072 = vsyncpa %s1071, 1

</llo_original>
